<compile_context>
chip_gen: v6e
topology: v6e:2x2x1
jax: 0.10.0
libtpu: 0.0.40
codegen_flags: <defaults>
</compile_context>

<pallas_src>
import math

import numpy as np

import jax
import jax.numpy as jnp
from jax import lax
from jax.experimental import pallas as pl
from jax.experimental.pallas import tpu as pltpu


# ----------------------------------------------------------------------------
# Fused per-node Pallas kernel
# ----------------------------------------------------------------------------

def _make_node_kernel(n_conv, n_id, fold_id, TH, GH, Hn, WC, mxu_dtype):
    """Kernel for one graph node.

    Ref order (inputs, outputs, scratch):
      per conv edge i: img_i (1,Hn,WC) resident predecessor activation,
                       band_i (3,WC,WC) banded 3x3 weights (kh taps),
                       bias_i (1,WC), scale_i (1,1) deferred 1/||.||_F
      id_j   (1,TH,WC) : standalone identity-edge tile
      pre    (1,TH,WC) : un-normalised node activation tile
      sq     (1,1,WC)  : per-image row-reduced sum-of-squares accumulator
      pad_i  (Hn+16,WC): f32 VMEM halo scratch (8 zero rows top & bottom)
    """
    TWIN = TH + 16

    def kernel(*refs):
        conv_refs = [refs[4 * i: 4 * i + 4] for i in range(n_conv)]
        id_refs = refs[4 * n_conv: 4 * n_conv + n_id]
        pre_ref = refs[4 * n_conv + n_id]
        sq_ref = refs[4 * n_conv + n_id + 1]
        pad_refs = refs[4 * n_conv + n_id + 2: 4 * n_conv + n_id + 2 + n_conv]

        h = pl.program_id(1)
        row0 = pl.multiple_of(h * TH, 8)

        # Fill the VMEM halo scratch once per image (no HBM pad pass):
        # rows [0,8)=0 | [8, 8+Hn)=image | [8+Hn, 8+Hn+8)=0.
        @pl.when(h == 0)
        def _fill():
            zeros8 = jnp.zeros((8, WC), jnp.float32)
            for i in range(n_conv):
                img_ref = conv_refs[i][0]
                pad_ref = pad_refs[i]
                pad_ref[pl.ds(0, 8), :] = zeros8
                pad_ref[pl.ds(Hn + 8, 8), :] = zeros8
                for c in range(GH):  # chunked VMEM->VMEM copy (aligned stores)
                    pad_ref[pl.ds(8 + c * TH, TH), :] = (
                        img_ref[0, pl.ds(c * TH, TH), :].astype(jnp.float32))

        acc = jnp.zeros((TH, WC), jnp.float32)
        for i in range(n_conv):
            img_ref, band_ref, bias_ref, scale_ref = conv_refs[i]
            # One aligned TWIN-row window load; the kh taps are static value
            # slices (padded row -1 of the image sits at scratch row 7).
            win = pad_refs[i][pl.ds(row0, TWIN), :]
            y = jnp.dot(win[7:7 + TH].astype(mxu_dtype), band_ref[0],
                        preferred_element_type=jnp.float32)
            y = y + jnp.dot(win[8:8 + TH].astype(mxu_dtype), band_ref[1],
                            preferred_element_type=jnp.float32)
            y = y + jnp.dot(win[9:9 + TH].astype(mxu_dtype), band_ref[2],
                            preferred_element_type=jnp.float32)
            # Deferred predecessor norm: ReLU(conv(s*x)+b) == ReLU(s*conv(x)+b)
            y = y * scale_ref[...] + bias_ref[...]
            acc = acc + jnp.maximum(y, 0.0)                  # per-edge ReLU
            if fold_id[i]:
                # Identity edge sharing this conv edge's source: read the tile
                # straight from the resident block -- no extra HBM input.
                acc = acc + img_ref[0, pl.ds(row0, TH), :].astype(jnp.float32)
        for id_ref in id_refs:
            acc = acc + id_ref[0].astype(jnp.float32)

        pre_ref[0] = acc.astype(pre_ref.dtype)

        # Frobenius-norm partial: reduce over rows here (XLU) so the HBM
        # writeback is only (1, WC) per image instead of a full slab.
        @pl.when(h == 0)
        def _init():
            sq_ref[...] = jnp.zeros_like(sq_ref)

        sq_ref[0] = sq_ref[0] + jnp.sum(acc * acc, axis=0, keepdims=True)

    return kernel


def _fused_node(conv_inputs, identity_inputs, fold_id, *, N, Hn, WC, TH,
                act_dtype, mxu_dtype):
    """Run the fused node kernel.  Returns (pre (N,Hn,WC), sum-of-squares)."""
    assert conv_inputs, "identity-only nodes are special-cased by the caller"
    GH = Hn // TH
    n_conv, n_id = len(conv_inputs), len(identity_inputs)
    act_bytes = np.dtype(act_dtype).itemsize
    mxu_bytes = np.dtype(mxu_dtype).itemsize

    args, in_specs = [], []
    for img, band, bias_row, scale in conv_inputs:
        args += [img, band, bias_row, scale]
        in_specs += [
            pl.BlockSpec((1, Hn, WC), lambda n, h: (n, 0, 0)),  # resident image
            pl.BlockSpec((3, WC, WC), lambda n, h: (0, 0, 0)),  # invariant band
            pl.BlockSpec((1, WC), lambda n, h: (0, 0)),         # invariant bias
            pl.BlockSpec((1, 1), lambda n, h: (0, 0)),          # deferred norm
        ]
    for ident in identity_inputs:
        args.append(ident)
        in_specs.append(pl.BlockSpec((1, TH, WC), lambda n, h: (n, h, 0)))

    out_shape = (jax.ShapeDtypeStruct((N, Hn, WC), act_dtype),
                 jax.ShapeDtypeStruct((N, 1, WC), jnp.float32))
    out_specs = (pl.BlockSpec((1, TH, WC), lambda n, h: (n, h, 0)),
                 pl.BlockSpec((1, 1, WC), lambda n, h: (n, 0, 0)))

    scratch_shapes = [pltpu.VMEM((Hn + 16, WC), jnp.float32)
                      for _ in range(n_conv)]

    # VMEM budget derived from actual buffer sizes (double-buffered pipelined
    # operands + resident halo scratch), clamped to sane limits.
    vmem_bytes = n_conv * (2 * Hn * WC * act_bytes
                           + 2 * 3 * WC * WC * mxu_bytes
                           + (Hn + 16) * WC * 4)
    vmem_bytes += (n_id + 1) * 2 * TH * WC * act_bytes
    vmem_bytes += 2 * WC * 4 + n_conv * 2 * (WC + 1) * 4
    vmem_limit = int(min(max(vmem_bytes + (4 << 20), 32 << 20), 110 << 20))

    flops = 6 * N * Hn * n_conv * WC * WC + 6 * N * Hn * WC * (n_conv + n_id)
    bytes_accessed = (N * Hn * WC * act_bytes * (n_conv + n_id + 1)
                      + n_conv * (3 * WC * WC * mxu_bytes + 8 * WC)
                      + N * WC * 4)

    pre, sq = pl.pallas_call(
        _make_node_kernel(n_conv, n_id, tuple(fold_id), TH, GH, Hn, WC,
                          mxu_dtype),
        grid=(N, GH),
        in_specs=in_specs,
        out_specs=out_specs,
        out_shape=out_shape,
        scratch_shapes=scratch_shapes,
        compiler_params=pltpu.CompilerParams(
            dimension_semantics=("parallel", "arbitrary"),
            vmem_limit_bytes=vmem_limit),
        cost_estimate=pl.CostEstimate(
            flops=flops, transcendentals=0, bytes_accessed=bytes_accessed),
    )(*args)
    return pre, jnp.sum(sq)


# ----------------------------------------------------------------------------
# Banded conv weights for the row-folded lane layout (built once per edge)
# ----------------------------------------------------------------------------

def _banded_conv_weights(w_hwio, W, R):
    """(3,3,Cin,Cout) HWIO -> (3, R*W*C, R*W*C) block-banded matrices.

    Lane index = ri*W*C + wi*C + ci (R image rows folded per super-row).
    band[t][ri*W*C+wi*C+ci, ro*W*C+wo*C+co] = w[kh, kw, ci, co] with
    kh = (t-1)*R + ri - ro + 1 and kw = wi - wo + 1 when both lie in [0,3);
    zeros elsewhere encode the spatial zero padding.
    """
    w = np.asarray(jax.device_get(w_hwio), dtype=np.float32)
    C = w.shape[2]
    WC = R * W * C
    band = np.zeros((3, R, W, C, R, W, C), np.float32)
    for t in range(3):
        for ri in range(R):
            for ro in range(R):
                kh = (t - 1) * R + ri - ro + 1
                if not 0 <= kh < 3:
                    continue
                for kw in range(3):
                    for wo in range(W):
                        wi = wo + kw - 1
                        if 0 <= wi < W:
                            band[t, ri, wi, :, ro, wo, :] = w[kh, kw]
    return band.reshape(3, WC, WC)


def _pick_fold(H, W, C, lanes=128):
    """Smallest row-fold R (dividing H) making the lane axis 128-friendly."""
    wc = W * C
    if wc % lanes == 0:
        return 1
    for r in range(2, 9):
        if H % r == 0 and (r * wc) % lanes == 0:
            return r
    for r in range(2, 9):
        if H % r == 0 and r * wc >= lanes:
            return r
    return 1


def _pick_tile_rows(Hn, max_rows=512):
    """Largest 8-aligned row tile dividing Hn (big tiles amortize step cost)."""
    best = None
    for th in range(8, min(Hn, max_rows) + 1, 8):
        if Hn % th == 0:
            best = th
    return best if best is not None else Hn


# ----------------------------------------------------------------------------
# Graph + GraphNN (host-side structure, parameters, forward orchestration)
# ----------------------------------------------------------------------------

class SimpleDAG:
    input_node = 0
    output_node = 3
    edges = [(0, 1), (0, 2), (1, 2), (1, 3), (2, 3)]

    def get_ordered_nodes(self):
        return [1, 2, 3]

    def get_predecessors(self, v):
        return [u for (u, w) in self.edges if w == v]

    def is_input_edge(self, u, v):
        return u == self.input_node


class GraphNNPallas:
    """operation=CONV(3x3, stride 1, pad 1), activation=ReLU, normalize=True."""

    def __init__(self, graph, number_channels, kernel_size=3, normalize=True,
                 tile_rows=None, act_dtype=jnp.float32, key=None):
        assert kernel_size == 3
        self.graph = graph
        self.C = number_channels
        self.normalize = normalize
        self.tile_rows = tile_rows
        self.act_dtype = np.dtype(act_dtype)          # activation storage dtype
        # MXU operands follow the storage dtype (bf16 is MXU-native on
        # v5e/v6e/v7x); accumulation and all VPU math stay f32.
        self.mxu_dtype = (np.dtype(jnp.bfloat16)
                          if self.act_dtype == np.dtype(jnp.bfloat16)
                          else np.dtype(jnp.float32))
        # nn.Conv2d(C, C, 3) style init: uniform(+-1/sqrt(fan_in)), HWIO.
        fan_in = number_channels * kernel_size * kernel_size
        bound = 1.0 / math.sqrt(fan_in)
        key = jax.random.PRNGKey(0) if key is None else key
        self.params = {}
        for edge in graph.edges:
            if graph.is_input_edge(*edge):
                continue  # Identity edge, no params
            key, kw_, kb_ = jax.random.split(key, 3)
            w = jax.random.uniform(kw_, (3, 3, self.C, self.C),
                                   jnp.float32, -bound, bound)
            b = jax.random.uniform(kb_, (self.C,), jnp.float32, -bound, bound)
            self.params[edge] = (w, b)
        self._band_cache = {}   # (edge, W, R) -> (band (3,WC,WC), bias (1,WC))

    def _edge_band(self, edge, W, R):
        """Banded weights / tiled bias, built once per (edge, geometry)."""
        key = (edge, W, R)
        if key not in self._band_cache:
            w, b = self.params[edge]
            band = jnp.asarray(_banded_conv_weights(w, W, R), self.mxu_dtype)
            bias = np.tile(np.asarray(jax.device_get(b), np.float32),
                           R * W).reshape(1, R * W * self.C)
            self._band_cache[key] = (band, jnp.asarray(bias, jnp.float32))
        return self._band_cache[key]

    def __call__(self, x_nchw):
        N, C, H, W = x_nchw.shape
        assert C == self.C
        g = self.graph

        R = _pick_fold(H, W, C)                 # image rows folded into lanes
        assert H % R == 0
        Hn, WC = H // R, R * W * C
        TH = (self.tile_rows if self.tile_rows is not None
              else _pick_tile_rows(Hn))
        assert Hn % TH == 0 and (TH % 8 == 0 or TH == Hn)

        # NCHW -> row-folded lane-dense slab (layout plumbing, not compute).
        x_rows = jnp.transpose(x_nchw, (0, 2, 3, 1)).reshape(N, Hn, WC)
        x_rows = x_rows.astype(self.act_dtype)

        one = jnp.ones((1, 1), jnp.float32)
        vals = {g.input_node: x_rows}           # un-normalised activations
        scales = {g.input_node: one}            # deferred 1/||.||_F factors
        ssq_input = None

        def norm_scale(ssq):
            if not self.normalize:
                return one
            # NOTE: matches the reference (NaN/inf if the node is all-zero).
            return (1.0 / jnp.sqrt(ssq)).astype(jnp.float32).reshape(1, 1)

        for v in g.get_ordered_nodes():
            conv_inputs, fold_id, id_srcs = [], [], []
            for p in g.get_predecessors(v):
                if g.is_input_edge(p, v):
                    id_srcs.append(vals[p])     # identity edge (no params)
                else:
                    band, bias = self._edge_band((p, v), W, R)
                    conv_inputs.append((vals[p], band, bias, scales[p]))
                    fold_id.append(False)

            if not conv_inputs:
                # Identity-only node: alias the input slab -- no kernel, no
                # extra HBM pass; only its norm needs a (fused XLA) reduction.
                assert len(id_srcs) == 1
                pre_v = id_srcs[0]
                if self.normalize and ssq_input is None:
                    xf = x_rows.astype(jnp.float32)
                    ssq_input = jnp.sum(xf * xf)
                ssq_v = ssq_input
            else:
                # Fold identity edges whose source already enters as a conv
                # edge's resident image (dedups an HBM read).
                rest_ids = []
                for src in id_srcs:
                    folded = False
                    for k in range(len(conv_inputs)):
                        if (conv_inputs[k][0] is src) and not fold_id[k]:
                            fold_id[k] = True
                            folded = True
                            break
                    if not folded:
                        rest_ids.append(src)
                pre_v, ssq_v = _fused_node(
                    conv_inputs, rest_ids, fold_id, N=N, Hn=Hn, WC=WC, TH=TH,
                    act_dtype=self.act_dtype, mxu_dtype=self.mxu_dtype)

            vals[v] = pre_v
            scales[v] = norm_scale(ssq_v)

        # Final deferred norm + un-fold back to NCHW; the scalar multiply
        # fuses into the XLA transpose copy (no extra full-size HBM pass).
        out = (vals[g.output_node].astype(jnp.float32)
               * scales[g.output_node][0, 0])
        out = out.reshape(N, Hn, R, W, C).reshape(N, H, W, C)
        return jnp.transpose(out, (0, 3, 1, 2))


# ----------------------------------------------------------------------------
# Pure-JAX reference (mirrors the PyTorch semantics in NCHW) for validation.
# ----------------------------------------------------------------------------

def _ref_conv_relu(x_nchw, w_hwio, b):
    w_oihw = jnp.transpose(w_hwio, (3, 2, 0, 1))
    y = lax.conv_general_dilated(
        x_nchw, w_oihw, window_strides=(1, 1), padding=((1, 1), (1, 1)),
        dimension_numbers=("NCHW", "OIHW", "NCHW"))
    return jnp.maximum(y + b[None, :, None, None], 0.0)


def _ref_forward(model, x_nchw):
    g = model.graph
    outputs = {g.input_node: x_nchw}
    for v in g.get_ordered_nodes():
        ins = []
        for p in g.get_predecessors(v):
            if g.is_input_edge(p, v):
                ins.append(outputs[p])
            else:
                w, b = model.params[(p, v)]
                ins.append(_ref_conv_relu(outputs[p], w, b))
        red = jnp.sum(jnp.stack(ins), axis=0)
        if model.normalize:
            red = red / jnp.linalg.norm(red.reshape(-1))
        outputs[v] = red
    return outputs[g.output_node]


# ----------------------------------------------------------------------------

if __name__ == "__main__":
    N, C, H, W = 2, 4, 16, 16
    key = jax.random.PRNGKey(0)
    kx, kp = jax.random.split(key)
    x = jax.random.normal(kx, (N, C, H, W), jnp.float32)

    # f32 path (exact parity with the reference).  W*C=64 -> row-fold R=2 ->
    # lane axis 128, one row-tile per image.
    model = GraphNNPallas(SimpleDAG(), number_channels=C, kernel_size=3,
                          normalize=True, key=kp)
    out = jax.block_until_ready(jax.jit(model.__call__)(x))
    ref = jax.block_until_ready(_ref_forward(model, x))
    assert out.shape == (N, C, H, W) and out.dtype == jnp.float32
    assert jnp.allclose(out, ref, rtol=1e-4, atol=1e-5), (
        float(jnp.max(jnp.abs(out - ref))))

    # Multi-row-tile config (exercises the VMEM halo scratch / sq accumulator
    # across grid steps: H=32 -> Hn=16, tile_rows=8 -> 2 tiles per image).
    x2 = jax.random.normal(kx, (N, C, 32, W), jnp.float32)
    model2 = GraphNNPallas(SimpleDAG(), number_channels=C, kernel_size=3,
                           normalize=True, tile_rows=8, key=kp)
    out2 = jax.block_until_ready(jax.jit(model2.__call__)(x2))
    ref2 = jax.block_until_ready(_ref_forward(model2, x2))
    assert jnp.allclose(out2, ref2, rtol=1e-4, atol=1e-5), (
        float(jnp.max(jnp.abs(out2 - ref2))))

    # bf16 activation-storage / bf16-MXU variant (same parameters): halves
    # activation HBM traffic in the bandwidth-bound regime; looser tolerance.
    model_bf16 = GraphNNPallas(SimpleDAG(), number_channels=C, kernel_size=3,
                               normalize=True, act_dtype=jnp.bfloat16, key=kp)
    model_bf16.params = model.params
    out_bf16 = jax.block_until_ready(jax.jit(model_bf16.__call__)(x))
    assert out_bf16.shape == (N, C, H, W)
    assert jnp.allclose(out_bf16, ref, rtol=5e-2, atol=5e-3), (
        float(jnp.max(jnp.abs(out_bf16 - ref))))

    print("KERNEL_OK")
</pallas_src>

<mosaic_0001>
module attributes {stable_mosaic.version = 11 : i64} {
  func.func @kernel(%arg0: i32, %arg1: i32, %arg2: memref<1x8x128xf32, #tpu.memory_space<vmem>>, %arg3: memref<3x128x128xf32, #tpu.memory_space<vmem>>, %arg4: memref<1x128xf32, #tpu.memory_space<vmem>>, %arg5: memref<1x1xf32, #tpu.memory_space<vmem>>, %arg6: memref<1x8x128xf32, #tpu.memory_space<vmem>>, %arg7: memref<1x1x128xf32, #tpu.memory_space<vmem>>, %arg8: memref<24x128xf32, #tpu.memory_space<vmem>>) attributes {dimension_semantics = [#tpu.dimension_semantics<parallel>, #tpu.dimension_semantics<arbitrary>], iteration_bounds = array<i64: 2, 1>, scalar_prefetch = 0 : i64, scratch_operands = 1 : i64, tpu.core_type = #tpu.core_type<tc>, window_params = [{transform_indices = @transform_0, window_bounds = array<i64: 1, 8, 128>}, {pipeline_mode = #tpu.pipeline_mode<synchronous>, transform_indices = @transform_1, window_bounds = array<i64: 3, 128, 128>}, {pipeline_mode = #tpu.pipeline_mode<synchronous>, transform_indices = @transform_2, window_bounds = array<i64: 1, 128>}, {pipeline_mode = #tpu.pipeline_mode<synchronous>, transform_indices = @transform_3, window_bounds = array<i64: 1, 1>}, {transform_indices = @transform_4, window_bounds = array<i64: 1, 8, 128>}, {transform_indices = @transform_5, window_bounds = array<i64: 1, 1, 128>}]} {
    %c8_i32 = arith.constant 8 : i32
    %0 = arith.muli %arg1, %c8_i32 : i32
    %1 = tpu.assume_multiple %0, 8 : i32
    %c0_i32 = arith.constant 0 : i32
    %2 = arith.cmpi eq, %arg1, %c0_i32 : i32
    %3 = arith.extui %2 : i1 to i32
    %c0_i32_0 = arith.constant 0 : i32
    %4 = arith.cmpi ne, %3, %c0_i32_0 : i32
    scf.if %4 {
      %cst_30 = arith.constant 0.000000e+00 : f32
      %50 = vector.broadcast %cst_30 : f32 to vector<8x128xf32>
      %c0_31 = arith.constant 0 : index
      %c0_32 = arith.constant 0 : index
      %51 = vector.load %arg8[%c0_31, %c0_32] : memref<24x128xf32, #tpu.memory_space<vmem>>, vector<8x128xf32>
      tpu.vector_store %arg8[%c0_31, %c0_32], %50 {strides = array<i32>} : memref<24x128xf32, #tpu.memory_space<vmem>>, vector<8x128xf32>,
      %c16 = arith.constant 16 : index
      %c0_33 = arith.constant 0 : index
      %52 = vector.load %arg8[%c16, %c0_33] : memref<24x128xf32, #tpu.memory_space<vmem>>, vector<8x128xf32>
      tpu.vector_store %arg8[%c16, %c0_33], %50 {strides = array<i32>} : memref<24x128xf32, #tpu.memory_space<vmem>>, vector<8x128xf32>,
      %c0_34 = arith.constant 0 : index
      %c0_35 = arith.constant 0 : index
      %c0_36 = arith.constant 0 : index
      %53 = vector.load %arg2[%c0_34, %c0_35, %c0_36] : memref<1x8x128xf32, #tpu.memory_space<vmem>>, vector<1x8x128xf32>
      %54 = vector.shape_cast %53 : vector<1x8x128xf32> to vector<8x128xf32>
      %c8 = arith.constant 8 : index
      %c0_37 = arith.constant 0 : index
      %55 = vector.load %arg8[%c8, %c0_37] : memref<24x128xf32, #tpu.memory_space<vmem>>, vector<8x128xf32>
      tpu.vector_store %arg8[%c8, %c0_37], %54 {strides = array<i32>} : memref<24x128xf32, #tpu.memory_space<vmem>>, vector<8x128xf32>,
    } else {
    }
    %cst = arith.constant 0.000000e+00 : f32
    %5 = vector.broadcast %cst : f32 to vector<8x128xf32>
    %6 = arith.index_cast %1 : i32 to index
    %c0 = arith.constant 0 : index
    %7 = vector.load %arg8[%6, %c0] : memref<24x128xf32, #tpu.memory_space<vmem>>, vector<24x128xf32>
    %8 = vector.extract_strided_slice %7 {offsets = [7, 0], sizes = [8, 128], strides = [1, 1]} : vector<24x128xf32> to vector<8x128xf32>
    %c0_1 = arith.constant 0 : index
    %c0_2 = arith.constant 0 : index
    %c0_3 = arith.constant 0 : index
    %9 = vector.load %arg3[%c0_1, %c0_2, %c0_3] : memref<3x128x128xf32, #tpu.memory_space<vmem>>, vector<1x128x128xf32>
    %10 = vector.shape_cast %9 : vector<1x128x128xf32> to vector<128x128xf32>
    %cst_4 = arith.constant dense<0.000000e+00> : vector<8x128xf32>
    %11 = tpu.matmul %8, %10, %cst_4 {dimension_numbers = #tpu.dot_dimension_numbers<[1], [0], [0], [1], [0, 0, 1, 1], [], []>} : vector<8x128xf32>, vector<128x128xf32>, vector<8x128xf32> -> vector<8x128xf32>
    %12 = vector.extract_strided_slice %7 {offsets = [8, 0], sizes = [8, 128], strides = [1, 1]} : vector<24x128xf32> to vector<8x128xf32>
    %c1 = arith.constant 1 : index
    %c0_5 = arith.constant 0 : index
    %c0_6 = arith.constant 0 : index
    %13 = vector.load %arg3[%c1, %c0_5, %c0_6] : memref<3x128x128xf32, #tpu.memory_space<vmem>>, vector<1x128x128xf32>
    %14 = vector.shape_cast %13 : vector<1x128x128xf32> to vector<128x128xf32>
    %cst_7 = arith.constant dense<0.000000e+00> : vector<8x128xf32>
    %15 = tpu.matmul %12, %14, %cst_7 {dimension_numbers = #tpu.dot_dimension_numbers<[1], [0], [0], [1], [0, 0, 1, 1], [], []>} : vector<8x128xf32>, vector<128x128xf32>, vector<8x128xf32> -> vector<8x128xf32>
    %16 = arith.addf %11, %15 : vector<8x128xf32>
    %17 = vector.extract_strided_slice %7 {offsets = [9, 0], sizes = [8, 128], strides = [1, 1]} : vector<24x128xf32> to vector<8x128xf32>
    %c2 = arith.constant 2 : index
    %c0_8 = arith.constant 0 : index
    %c0_9 = arith.constant 0 : index
    %18 = vector.load %arg3[%c2, %c0_8, %c0_9] : memref<3x128x128xf32, #tpu.memory_space<vmem>>, vector<1x128x128xf32>
    %19 = vector.shape_cast %18 : vector<1x128x128xf32> to vector<128x128xf32>
    %cst_10 = arith.constant dense<0.000000e+00> : vector<8x128xf32>
    %20 = tpu.matmul %17, %19, %cst_10 {dimension_numbers = #tpu.dot_dimension_numbers<[1], [0], [0], [1], [0, 0, 1, 1], [], []>} : vector<8x128xf32>, vector<128x128xf32>, vector<8x128xf32> -> vector<8x128xf32>
    %21 = arith.addf %16, %20 : vector<8x128xf32>
    %c0_11 = arith.constant 0 : index
    %c0_12 = arith.constant 0 : index
    %22 = vector.load %arg5[%c0_11, %c0_12] : memref<1x1xf32, #tpu.memory_space<vmem>>, vector<1x1xf32>
    %23 = vector.broadcast %22 : vector<1x1xf32> to vector<8x128xf32>
    %24 = arith.mulf %21, %23 : vector<8x128xf32>
    %c0_13 = arith.constant 0 : index
    %c0_14 = arith.constant 0 : index
    %25 = vector.load %arg4[%c0_13, %c0_14] : memref<1x128xf32, #tpu.memory_space<vmem>>, vector<1x128xf32>
    %26 = vector.broadcast %25 : vector<1x128xf32> to vector<8x128xf32>
    %27 = arith.addf %24, %26 : vector<8x128xf32>
    %cst_15 = arith.constant 0.000000e+00 : f32
    %28 = vector.broadcast %cst_15 : f32 to vector<8x128xf32>
    %29 = arith.maximumf %27, %28 : vector<8x128xf32>
    %30 = arith.addf %5, %29 : vector<8x128xf32>
    %c0_16 = arith.constant 0 : index
    %31 = arith.index_cast %1 : i32 to index
    %c0_17 = arith.constant 0 : index
    %32 = vector.load %arg2[%c0_16, %31, %c0_17] : memref<1x8x128xf32, #tpu.memory_space<vmem>>, vector<1x8x128xf32>
    %33 = vector.shape_cast %32 : vector<1x8x128xf32> to vector<8x128xf32>
    %34 = arith.addf %30, %33 : vector<8x128xf32>
    %c0_18 = arith.constant 0 : index
    %c0_19 = arith.constant 0 : index
    %c0_20 = arith.constant 0 : index
    %35 = vector.load %arg6[%c0_18, %c0_19, %c0_20] : memref<1x8x128xf32, #tpu.memory_space<vmem>>, vector<1x8x128xf32>
    %36 = vector.shape_cast %35 : vector<1x8x128xf32> to vector<8x128xf32>
    %37 = vector.shape_cast %34 : vector<8x128xf32> to vector<1x8x128xf32>
    tpu.vector_store %arg6[%c0_18, %c0_19, %c0_20], %37 {strides = array<i32>} : memref<1x8x128xf32, #tpu.memory_space<vmem>>, vector<1x8x128xf32>,
    %c0_i32_21 = arith.constant 0 : i32
    %38 = arith.cmpi eq, %arg1, %c0_i32_21 : i32
    %39 = arith.extui %38 : i1 to i32
    %c0_i32_22 = arith.constant 0 : i32
    %40 = arith.cmpi ne, %39, %c0_i32_22 : i32
    scf.if %40 {
      %cst_30 = arith.constant 0.000000e+00 : f32
      %50 = vector.broadcast %cst_30 : f32 to vector<1x1x128xf32>
      %c0_31 = arith.constant 0 : index
      %c0_32 = arith.constant 0 : index
      %c0_33 = arith.constant 0 : index
      %51 = vector.load %arg7[%c0_31, %c0_32, %c0_33] : memref<1x1x128xf32, #tpu.memory_space<vmem>>, vector<1x1x128xf32>
      tpu.vector_store %arg7[%c0_31, %c0_32, %c0_33], %50 {strides = array<i32>} : memref<1x1x128xf32, #tpu.memory_space<vmem>>, vector<1x1x128xf32>,
    } else {
    }
    %c0_23 = arith.constant 0 : index
    %c0_24 = arith.constant 0 : index
    %c0_25 = arith.constant 0 : index
    %41 = vector.load %arg7[%c0_23, %c0_24, %c0_25] : memref<1x1x128xf32, #tpu.memory_space<vmem>>, vector<1x1x128xf32>
    %42 = vector.shape_cast %41 : vector<1x1x128xf32> to vector<1x128xf32>
    %43 = arith.mulf %34, %34 : vector<8x128xf32>
    %cst_26 = arith.constant dense<0.000000e+00> : vector<128xf32>
    %44 = vector.multi_reduction <add>, %43, %cst_26 [0] : vector<8x128xf32> to vector<128xf32>
    %45 = vector.shape_cast %44 : vector<128xf32> to vector<1x128xf32>
    %46 = arith.addf %42, %45 : vector<1x128xf32>
    %c0_27 = arith.constant 0 : index
    %c0_28 = arith.constant 0 : index
    %c0_29 = arith.constant 0 : index
    %47 = vector.load %arg7[%c0_27, %c0_28, %c0_29] : memref<1x1x128xf32, #tpu.memory_space<vmem>>, vector<1x1x128xf32>
    %48 = vector.shape_cast %47 : vector<1x1x128xf32> to vector<1x128xf32>
    %49 = vector.shape_cast %46 : vector<1x128xf32> to vector<1x1x128xf32>
    tpu.vector_store %arg7[%c0_27, %c0_28, %c0_29], %49 {strides = array<i32>} : memref<1x1x128xf32, #tpu.memory_space<vmem>>, vector<1x1x128xf32>,
    return
  }
  func.func @transform_0(%arg0: i32, %arg1: i32) -> (i32, i32, i32) {
    %c0_i32 = arith.constant 0 : i32
    %c0_i32_0 = arith.constant 0 : i32
    %c0_i32_1 = arith.constant 0 : i32
    return %arg0, %c0_i32, %c0_i32_0 : i32, i32, i32
  }
  func.func @transform_1(%arg0: i32, %arg1: i32) -> (i32, i32, i32) {
    %c0_i32 = arith.constant 0 : i32
    %c0_i32_0 = arith.constant 0 : i32
    %c0_i32_1 = arith.constant 0 : i32
    %c0_i32_2 = arith.constant 0 : i32
    return %c0_i32, %c0_i32_0, %c0_i32_1 : i32, i32, i32
  }
  func.func @transform_2(%arg0: i32, %arg1: i32) -> (i32, i32) {
    %c0_i32 = arith.constant 0 : i32
    %c0_i32_0 = arith.constant 0 : i32
    %c0_i32_1 = arith.constant 0 : i32
    return %c0_i32, %c0_i32_0 : i32, i32
  }
  func.func @transform_3(%arg0: i32, %arg1: i32) -> (i32, i32) {
    %c0_i32 = arith.constant 0 : i32
    %c0_i32_0 = arith.constant 0 : i32
    %c0_i32_1 = arith.constant 0 : i32
    return %c0_i32, %c0_i32_0 : i32, i32
  }
  func.func @transform_4(%arg0: i32, %arg1: i32) -> (i32, i32, i32) {
    %c0_i32 = arith.constant 0 : i32
    %c0_i32_0 = arith.constant 0 : i32
    return %arg0, %arg1, %c0_i32 : i32, i32, i32
  }
  func.func @transform_5(%arg0: i32, %arg1: i32) -> (i32, i32, i32) {
    %c0_i32 = arith.constant 0 : i32
    %c0_i32_0 = arith.constant 0 : i32
    %c0_i32_1 = arith.constant 0 : i32
    return %arg0, %c0_i32, %c0_i32_0 : i32, i32, i32
  }
}

module attributes {stable_mosaic.version = 11 : i64} {
  func.func @kernel(%arg0: i32, %arg1: i32, %arg2: memref<1x8x128xf32, #tpu.memory_space<vmem>>, %arg3: memref<3x128x128xf32, #tpu.memory_space<vmem>>, %arg4: memref<1x128xf32, #tpu.memory_space<vmem>>, %arg5: memref<1x1xf32, #tpu.memory_space<vmem>>, %arg6: memref<1x8x128xf32, #tpu.memory_space<vmem>>, %arg7: memref<3x128x128xf32, #tpu.memory_space<vmem>>, %arg8: memref<1x128xf32, #tpu.memory_space<vmem>>, %arg9: memref<1x1xf32, #tpu.memory_space<vmem>>, %arg10: memref<1x8x128xf32, #tpu.memory_space<vmem>>, %arg11: memref<1x1x128xf32, #tpu.memory_space<vmem>>, %arg12: memref<24x128xf32, #tpu.memory_space<vmem>>, %arg13: memref<24x128xf32, #tpu.memory_space<vmem>>) attributes {dimension_semantics = [#tpu.dimension_semantics<parallel>, #tpu.dimension_semantics<arbitrary>], iteration_bounds = array<i64: 2, 1>, scalar_prefetch = 0 : i64, scratch_operands = 2 : i64, tpu.core_type = #tpu.core_type<tc>, window_params = [{transform_indices = @transform_0, window_bounds = array<i64: 1, 8, 128>}, {pipeline_mode = #tpu.pipeline_mode<synchronous>, transform_indices = @transform_1, window_bounds = array<i64: 3, 128, 128>}, {pipeline_mode = #tpu.pipeline_mode<synchronous>, transform_indices = @transform_2, window_bounds = array<i64: 1, 128>}, {pipeline_mode = #tpu.pipeline_mode<synchronous>, transform_indices = @transform_3, window_bounds = array<i64: 1, 1>}, {transform_indices = @transform_4, window_bounds = array<i64: 1, 8, 128>}, {pipeline_mode = #tpu.pipeline_mode<synchronous>, transform_indices = @transform_5, window_bounds = array<i64: 3, 128, 128>}, {pipeline_mode = #tpu.pipeline_mode<synchronous>, transform_indices = @transform_6, window_bounds = array<i64: 1, 128>}, {pipeline_mode = #tpu.pipeline_mode<synchronous>, transform_indices = @transform_7, window_bounds = array<i64: 1, 1>}, {transform_indices = @transform_8, window_bounds = array<i64: 1, 8, 128>}, {transform_indices = @transform_9, window_bounds = array<i64: 1, 1, 128>}]} {
    %c8_i32 = arith.constant 8 : i32
    %0 = arith.muli %arg1, %c8_i32 : i32
    %1 = tpu.assume_multiple %0, 8 : i32
    %c0_i32 = arith.constant 0 : i32
    %2 = arith.cmpi eq, %arg1, %c0_i32 : i32
    %3 = arith.extui %2 : i1 to i32
    %c0_i32_0 = arith.constant 0 : i32
    %4 = arith.cmpi ne, %3, %c0_i32_0 : i32
    scf.if %4 {
      %cst_46 = arith.constant 0.000000e+00 : f32
      %71 = vector.broadcast %cst_46 : f32 to vector<8x128xf32>
      %c0_47 = arith.constant 0 : index
      %c0_48 = arith.constant 0 : index
      %72 = vector.load %arg12[%c0_47, %c0_48] : memref<24x128xf32, #tpu.memory_space<vmem>>, vector<8x128xf32>
      tpu.vector_store %arg12[%c0_47, %c0_48], %71 {strides = array<i32>} : memref<24x128xf32, #tpu.memory_space<vmem>>, vector<8x128xf32>,
      %c16 = arith.constant 16 : index
      %c0_49 = arith.constant 0 : index
      %73 = vector.load %arg12[%c16, %c0_49] : memref<24x128xf32, #tpu.memory_space<vmem>>, vector<8x128xf32>
      tpu.vector_store %arg12[%c16, %c0_49], %71 {strides = array<i32>} : memref<24x128xf32, #tpu.memory_space<vmem>>, vector<8x128xf32>,
      %c0_50 = arith.constant 0 : index
      %c0_51 = arith.constant 0 : index
      %c0_52 = arith.constant 0 : index
      %74 = vector.load %arg2[%c0_50, %c0_51, %c0_52] : memref<1x8x128xf32, #tpu.memory_space<vmem>>, vector<1x8x128xf32>
      %75 = vector.shape_cast %74 : vector<1x8x128xf32> to vector<8x128xf32>
      %c8 = arith.constant 8 : index
      %c0_53 = arith.constant 0 : index
      %76 = vector.load %arg12[%c8, %c0_53] : memref<24x128xf32, #tpu.memory_space<vmem>>, vector<8x128xf32>
      tpu.vector_store %arg12[%c8, %c0_53], %75 {strides = array<i32>} : memref<24x128xf32, #tpu.memory_space<vmem>>, vector<8x128xf32>,
      %c0_54 = arith.constant 0 : index
      %c0_55 = arith.constant 0 : index
      %77 = vector.load %arg13[%c0_54, %c0_55] : memref<24x128xf32, #tpu.memory_space<vmem>>, vector<8x128xf32>
      tpu.vector_store %arg13[%c0_54, %c0_55], %71 {strides = array<i32>} : memref<24x128xf32, #tpu.memory_space<vmem>>, vector<8x128xf32>,
      %c16_56 = arith.constant 16 : index
      %c0_57 = arith.constant 0 : index
      %78 = vector.load %arg13[%c16_56, %c0_57] : memref<24x128xf32, #tpu.memory_space<vmem>>, vector<8x128xf32>
      tpu.vector_store %arg13[%c16_56, %c0_57], %71 {strides = array<i32>} : memref<24x128xf32, #tpu.memory_space<vmem>>, vector<8x128xf32>,
      %c0_58 = arith.constant 0 : index
      %c0_59 = arith.constant 0 : index
      %c0_60 = arith.constant 0 : index
      %79 = vector.load %arg6[%c0_58, %c0_59, %c0_60] : memref<1x8x128xf32, #tpu.memory_space<vmem>>, vector<1x8x128xf32>
      %80 = vector.shape_cast %79 : vector<1x8x128xf32> to vector<8x128xf32>
      %c8_61 = arith.constant 8 : index
      %c0_62 = arith.constant 0 : index
      %81 = vector.load %arg13[%c8_61, %c0_62] : memref<24x128xf32, #tpu.memory_space<vmem>>, vector<8x128xf32>
      tpu.vector_store %arg13[%c8_61, %c0_62], %80 {strides = array<i32>} : memref<24x128xf32, #tpu.memory_space<vmem>>, vector<8x128xf32>,
    } else {
    }
    %cst = arith.constant 0.000000e+00 : f32
    %5 = vector.broadcast %cst : f32 to vector<8x128xf32>
    %6 = arith.index_cast %1 : i32 to index
    %c0 = arith.constant 0 : index
    %7 = vector.load %arg12[%6, %c0] : memref<24x128xf32, #tpu.memory_space<vmem>>, vector<24x128xf32>
    %8 = vector.extract_strided_slice %7 {offsets = [7, 0], sizes = [8, 128], strides = [1, 1]} : vector<24x128xf32> to vector<8x128xf32>
    %c0_1 = arith.constant 0 : index
    %c0_2 = arith.constant 0 : index
    %c0_3 = arith.constant 0 : index
    %9 = vector.load %arg3[%c0_1, %c0_2, %c0_3] : memref<3x128x128xf32, #tpu.memory_space<vmem>>, vector<1x128x128xf32>
    %10 = vector.shape_cast %9 : vector<1x128x128xf32> to vector<128x128xf32>
    %cst_4 = arith.constant dense<0.000000e+00> : vector<8x128xf32>
    %11 = tpu.matmul %8, %10, %cst_4 {dimension_numbers = #tpu.dot_dimension_numbers<[1], [0], [0], [1], [0, 0, 1, 1], [], []>} : vector<8x128xf32>, vector<128x128xf32>, vector<8x128xf32> -> vector<8x128xf32>
    %12 = vector.extract_strided_slice %7 {offsets = [8, 0], sizes = [8, 128], strides = [1, 1]} : vector<24x128xf32> to vector<8x128xf32>
    %c1 = arith.constant 1 : index
    %c0_5 = arith.constant 0 : index
    %c0_6 = arith.constant 0 : index
    %13 = vector.load %arg3[%c1, %c0_5, %c0_6] : memref<3x128x128xf32, #tpu.memory_space<vmem>>, vector<1x128x128xf32>
    %14 = vector.shape_cast %13 : vector<1x128x128xf32> to vector<128x128xf32>
    %cst_7 = arith.constant dense<0.000000e+00> : vector<8x128xf32>
    %15 = tpu.matmul %12, %14, %cst_7 {dimension_numbers = #tpu.dot_dimension_numbers<[1], [0], [0], [1], [0, 0, 1, 1], [], []>} : vector<8x128xf32>, vector<128x128xf32>, vector<8x128xf32> -> vector<8x128xf32>
    %16 = arith.addf %11, %15 : vector<8x128xf32>
    %17 = vector.extract_strided_slice %7 {offsets = [9, 0], sizes = [8, 128], strides = [1, 1]} : vector<24x128xf32> to vector<8x128xf32>
    %c2 = arith.constant 2 : index
    %c0_8 = arith.constant 0 : index
    %c0_9 = arith.constant 0 : index
    %18 = vector.load %arg3[%c2, %c0_8, %c0_9] : memref<3x128x128xf32, #tpu.memory_space<vmem>>, vector<1x128x128xf32>
    %19 = vector.shape_cast %18 : vector<1x128x128xf32> to vector<128x128xf32>
    %cst_10 = arith.constant dense<0.000000e+00> : vector<8x128xf32>
    %20 = tpu.matmul %17, %19, %cst_10 {dimension_numbers = #tpu.dot_dimension_numbers<[1], [0], [0], [1], [0, 0, 1, 1], [], []>} : vector<8x128xf32>, vector<128x128xf32>, vector<8x128xf32> -> vector<8x128xf32>
    %21 = arith.addf %16, %20 : vector<8x128xf32>
    %c0_11 = arith.constant 0 : index
    %c0_12 = arith.constant 0 : index
    %22 = vector.load %arg5[%c0_11, %c0_12] : memref<1x1xf32, #tpu.memory_space<vmem>>, vector<1x1xf32>
    %23 = vector.broadcast %22 : vector<1x1xf32> to vector<8x128xf32>
    %24 = arith.mulf %21, %23 : vector<8x128xf32>
    %c0_13 = arith.constant 0 : index
    %c0_14 = arith.constant 0 : index
    %25 = vector.load %arg4[%c0_13, %c0_14] : memref<1x128xf32, #tpu.memory_space<vmem>>, vector<1x128xf32>
    %26 = vector.broadcast %25 : vector<1x128xf32> to vector<8x128xf32>
    %27 = arith.addf %24, %26 : vector<8x128xf32>
    %cst_15 = arith.constant 0.000000e+00 : f32
    %28 = vector.broadcast %cst_15 : f32 to vector<8x128xf32>
    %29 = arith.maximumf %27, %28 : vector<8x128xf32>
    %30 = arith.addf %5, %29 : vector<8x128xf32>
    %31 = arith.index_cast %1 : i32 to index
    %c0_16 = arith.constant 0 : index
    %32 = vector.load %arg13[%31, %c0_16] : memref<24x128xf32, #tpu.memory_space<vmem>>, vector<24x128xf32>
    %33 = vector.extract_strided_slice %32 {offsets = [7, 0], sizes = [8, 128], strides = [1, 1]} : vector<24x128xf32> to vector<8x128xf32>
    %c0_17 = arith.constant 0 : index
    %c0_18 = arith.constant 0 : index
    %c0_19 = arith.constant 0 : index
    %34 = vector.load %arg7[%c0_17, %c0_18, %c0_19] : memref<3x128x128xf32, #tpu.memory_space<vmem>>, vector<1x128x128xf32>
    %35 = vector.shape_cast %34 : vector<1x128x128xf32> to vector<128x128xf32>
    %cst_20 = arith.constant dense<0.000000e+00> : vector<8x128xf32>
    %36 = tpu.matmul %33, %35, %cst_20 {dimension_numbers = #tpu.dot_dimension_numbers<[1], [0], [0], [1], [0, 0, 1, 1], [], []>} : vector<8x128xf32>, vector<128x128xf32>, vector<8x128xf32> -> vector<8x128xf32>
    %37 = vector.extract_strided_slice %32 {offsets = [8, 0], sizes = [8, 128], strides = [1, 1]} : vector<24x128xf32> to vector<8x128xf32>
    %c1_21 = arith.constant 1 : index
    %c0_22 = arith.constant 0 : index
    %c0_23 = arith.constant 0 : index
    %38 = vector.load %arg7[%c1_21, %c0_22, %c0_23] : memref<3x128x128xf32, #tpu.memory_space<vmem>>, vector<1x128x128xf32>
    %39 = vector.shape_cast %38 : vector<1x128x128xf32> to vector<128x128xf32>
    %cst_24 = arith.constant dense<0.000000e+00> : vector<8x128xf32>
    %40 = tpu.matmul %37, %39, %cst_24 {dimension_numbers = #tpu.dot_dimension_numbers<[1], [0], [0], [1], [0, 0, 1, 1], [], []>} : vector<8x128xf32>, vector<128x128xf32>, vector<8x128xf32> -> vector<8x128xf32>
    %41 = arith.addf %36, %40 : vector<8x128xf32>
    %42 = vector.extract_strided_slice %32 {offsets = [9, 0], sizes = [8, 128], strides = [1, 1]} : vector<24x128xf32> to vector<8x128xf32>
    %c2_25 = arith.constant 2 : index
    %c0_26 = arith.constant 0 : index
    %c0_27 = arith.constant 0 : index
    %43 = vector.load %arg7[%c2_25, %c0_26, %c0_27] : memref<3x128x128xf32, #tpu.memory_space<vmem>>, vector<1x128x128xf32>
    %44 = vector.shape_cast %43 : vector<1x128x128xf32> to vector<128x128xf32>
    %cst_28 = arith.constant dense<0.000000e+00> : vector<8x128xf32>
    %45 = tpu.matmul %42, %44, %cst_28 {dimension_numbers = #tpu.dot_dimension_numbers<[1], [0], [0], [1], [0, 0, 1, 1], [], []>} : vector<8x128xf32>, vector<128x128xf32>, vector<8x128xf32> -> vector<8x128xf32>
    %46 = arith.addf %41, %45 : vector<8x128xf32>
    %c0_29 = arith.constant 0 : index
    %c0_30 = arith.constant 0 : index
    %47 = vector.load %arg9[%c0_29, %c0_30] : memref<1x1xf32, #tpu.memory_space<vmem>>, vector<1x1xf32>
    %48 = vector.broadcast %47 : vector<1x1xf32> to vector<8x128xf32>
    %49 = arith.mulf %46, %48 : vector<8x128xf32>
    %c0_31 = arith.constant 0 : index
    %c0_32 = arith.constant 0 : index
    %50 = vector.load %arg8[%c0_31, %c0_32] : memref<1x128xf32, #tpu.memory_space<vmem>>, vector<1x128xf32>
    %51 = vector.broadcast %50 : vector<1x128xf32> to vector<8x128xf32>
    %52 = arith.addf %49, %51 : vector<8x128xf32>
    %cst_33 = arith.constant 0.000000e+00 : f32
    %53 = vector.broadcast %cst_33 : f32 to vector<8x128xf32>
    %54 = arith.maximumf %52, %53 : vector<8x128xf32>
    %55 = arith.addf %30, %54 : vector<8x128xf32>
    %c0_34 = arith.constant 0 : index
    %c0_35 = arith.constant 0 : index
    %c0_36 = arith.constant 0 : index
    %56 = vector.load %arg10[%c0_34, %c0_35, %c0_36] : memref<1x8x128xf32, #tpu.memory_space<vmem>>, vector<1x8x128xf32>
    %57 = vector.shape_cast %56 : vector<1x8x128xf32> to vector<8x128xf32>
    %58 = vector.shape_cast %55 : vector<8x128xf32> to vector<1x8x128xf32>
    tpu.vector_store %arg10[%c0_34, %c0_35, %c0_36], %58 {strides = array<i32>} : memref<1x8x128xf32, #tpu.memory_space<vmem>>, vector<1x8x128xf32>,
    %c0_i32_37 = arith.constant 0 : i32
    %59 = arith.cmpi eq, %arg1, %c0_i32_37 : i32
    %60 = arith.extui %59 : i1 to i32
    %c0_i32_38 = arith.constant 0 : i32
    %61 = arith.cmpi ne, %60, %c0_i32_38 : i32
    scf.if %61 {
      %cst_46 = arith.constant 0.000000e+00 : f32
      %71 = vector.broadcast %cst_46 : f32 to vector<1x1x128xf32>
      %c0_47 = arith.constant 0 : index
      %c0_48 = arith.constant 0 : index
      %c0_49 = arith.constant 0 : index
      %72 = vector.load %arg11[%c0_47, %c0_48, %c0_49] : memref<1x1x128xf32, #tpu.memory_space<vmem>>, vector<1x1x128xf32>
      tpu.vector_store %arg11[%c0_47, %c0_48, %c0_49], %71 {strides = array<i32>} : memref<1x1x128xf32, #tpu.memory_space<vmem>>, vector<1x1x128xf32>,
    } else {
    }
    %c0_39 = arith.constant 0 : index
    %c0_40 = arith.constant 0 : index
    %c0_41 = arith.constant 0 : index
    %62 = vector.load %arg11[%c0_39, %c0_40, %c0_41] : memref<1x1x128xf32, #tpu.memory_space<vmem>>, vector<1x1x128xf32>
    %63 = vector.shape_cast %62 : vector<1x1x128xf32> to vector<1x128xf32>
    %64 = arith.mulf %55, %55 : vector<8x128xf32>
    %cst_42 = arith.constant dense<0.000000e+00> : vector<128xf32>
    %65 = vector.multi_reduction <add>, %64, %cst_42 [0] : vector<8x128xf32> to vector<128xf32>
    %66 = vector.shape_cast %65 : vector<128xf32> to vector<1x128xf32>
    %67 = arith.addf %63, %66 : vector<1x128xf32>
    %c0_43 = arith.constant 0 : index
    %c0_44 = arith.constant 0 : index
    %c0_45 = arith.constant 0 : index
    %68 = vector.load %arg11[%c0_43, %c0_44, %c0_45] : memref<1x1x128xf32, #tpu.memory_space<vmem>>, vector<1x1x128xf32>
    %69 = vector.shape_cast %68 : vector<1x1x128xf32> to vector<1x128xf32>
    %70 = vector.shape_cast %67 : vector<1x128xf32> to vector<1x1x128xf32>
    tpu.vector_store %arg11[%c0_43, %c0_44, %c0_45], %70 {strides = array<i32>} : memref<1x1x128xf32, #tpu.memory_space<vmem>>, vector<1x1x128xf32>,
    return
  }
  func.func @transform_0(%arg0: i32, %arg1: i32) -> (i32, i32, i32) {
    %c0_i32 = arith.constant 0 : i32
    %c0_i32_0 = arith.constant 0 : i32
    %c0_i32_1 = arith.constant 0 : i32
    return %arg0, %c0_i32, %c0_i32_0 : i32, i32, i32
  }
  func.func @transform_1(%arg0: i32, %arg1: i32) -> (i32, i32, i32) {
    %c0_i32 = arith.constant 0 : i32
    %c0_i32_0 = arith.constant 0 : i32
    %c0_i32_1 = arith.constant 0 : i32
    %c0_i32_2 = arith.constant 0 : i32
    return %c0_i32, %c0_i32_0, %c0_i32_1 : i32, i32, i32
  }
  func.func @transform_2(%arg0: i32, %arg1: i32) -> (i32, i32) {
    %c0_i32 = arith.constant 0 : i32
    %c0_i32_0 = arith.constant 0 : i32
    %c0_i32_1 = arith.constant 0 : i32
    return %c0_i32, %c0_i32_0 : i32, i32
  }
  func.func @transform_3(%arg0: i32, %arg1: i32) -> (i32, i32) {
    %c0_i32 = arith.constant 0 : i32
    %c0_i32_0 = arith.constant 0 : i32
    %c0_i32_1 = arith.constant 0 : i32
    return %c0_i32, %c0_i32_0 : i32, i32
  }
  func.func @transform_4(%arg0: i32, %arg1: i32) -> (i32, i32, i32) {
    %c0_i32 = arith.constant 0 : i32
    %c0_i32_0 = arith.constant 0 : i32
    %c0_i32_1 = arith.constant 0 : i32
    return %arg0, %c0_i32, %c0_i32_0 : i32, i32, i32
  }
  func.func @transform_5(%arg0: i32, %arg1: i32) -> (i32, i32, i32) {
    %c0_i32 = arith.constant 0 : i32
    %c0_i32_0 = arith.constant 0 : i32
    %c0_i32_1 = arith.constant 0 : i32
    %c0_i32_2 = arith.constant 0 : i32
    return %c0_i32, %c0_i32_0, %c0_i32_1 : i32, i32, i32
  }
  func.func @transform_6(%arg0: i32, %arg1: i32) -> (i32, i32) {
    %c0_i32 = arith.constant 0 : i32
    %c0_i32_0 = arith.constant 0 : i32
    %c0_i32_1 = arith.constant 0 : i32
    return %c0_i32, %c0_i32_0 : i32, i32
  }
  func.func @transform_7(%arg0: i32, %arg1: i32) -> (i32, i32) {
    %c0_i32 = arith.constant 0 : i32
    %c0_i32_0 = arith.constant 0 : i32
    %c0_i32_1 = arith.constant 0 : i32
    return %c0_i32, %c0_i32_0 : i32, i32
  }
  func.func @transform_8(%arg0: i32, %arg1: i32) -> (i32, i32, i32) {
    %c0_i32 = arith.constant 0 : i32
    %c0_i32_0 = arith.constant 0 : i32
    return %arg0, %arg1, %c0_i32 : i32, i32, i32
  }
  func.func @transform_9(%arg0: i32, %arg1: i32) -> (i32, i32, i32) {
    %c0_i32 = arith.constant 0 : i32
    %c0_i32_0 = arith.constant 0 : i32
    %c0_i32_1 = arith.constant 0 : i32
    return %arg0, %c0_i32, %c0_i32_0 : i32, i32, i32
  }
}

</mosaic_0001>

<llo_original>
// kernel: a_call__.2
$region0: #{a_call__.2}
  #allocation0 [shape = 'u32[]', space=smem, size = 0x4, offset = 0x4, fixed_abs, tag = 'smem constant byte address 0x4 - core index']
  #allocation1 [shape = 'u32[144,128]{1,0:T(1,128)}', space=vmem, size = 0x12000, scoped, tag = 'internal scratch']
  #allocation2 [shape = 'f32[24,128]{1,0:T(8,128)}', space=vmem, size = 0x3000, scoped, tag = 'scratch operand']
  #allocation3 [shape = 'f32[1,1]{1,0:T(1,128)S(1)}', space=vmem, size = 0x200, scoped, tag = 'scoped memory for a_call__.2']
  %s0 = inlined_call_operand.vmem [shape: f32[2,8,128], index: 0, kind: input, shape index: {}]
  %s1 = inlined_call_operand.vmem [shape: f32[3,128,128], index: 1, kind: input, shape index: {}]
  %s2 = inlined_call_operand.vmem [shape: f32[1,128], index: 2, kind: input, shape index: {}]
  %s3 = inlined_call_operand.<no memory space> [shape: f32[1,1], index: 3, kind: input, shape index: {}]
  %s4 = inlined_call_operand.vmem [shape: f32[2,8,128], index: 4, kind: output, shape index: {0}]
  %s5 = inlined_call_operand.vmem [shape: f32[2,1,128], index: 5, kind: output, shape index: {1}]
  %6 = xla_tuple %s4, %s5
  %s7 = sld [smem:[#allocation0]]
  $region65: #{a_call__.2} parent=0
    _
  %s9 = ssub.s32 1, %s7
  %s10 = scalar_select 0, %s9, %s7
  %v11 = vstv %s3
  %12 = vst [vmem:[#allocation3] sm:$0x1] %v11
  loop: start=0, step=1, limit=4
  $region2: #{a_call__.2} parent=0 // loop_pre_header
    _
  $region3: #{a_call__.2} parent=0 // loop_header
    %s14 = sphi 0, %s18
    %p15 = scmp.ge.s32.totalorder %s14, 4
    %s21 = sphi 0, %s33
    %s22 = sphi 0, %s29
    %s23 = sphi 0, %s21
    %s24 = sphi 0, %s22
    %s25 = sphi 0, %s23
    %s26 = sphi 0, %s24
    %s36 = sphi 0, %s38
    %s39 = sphi 0, %s36
    %s40 = sphi 0, %s39
    %s56 = sphi 0, %s40
    %s60 = sphi 0, %s60
    %s62 = sphi 0, %s60
    %s63 = sphi 0, %s62
    %s77 = sphi 0, %s63
    %s81 = sphi 0, %s81
    %s83 = sphi 0, %s81
    %s84 = sphi 0, %s83
    %s98 = sphi 0, %s84
    %s102 = sphi 0, %s102
    %s104 = sphi 0, %s102
    %s105 = sphi 0, %s104
    %s119 = sphi 0, %s105
    %s127 = sphi 0, %s129
    %s130 = sphi 0, %s127
    %s131 = sphi 0, %s130
    %s147 = sphi 0, %s131
    %s153 = sphi 0, %s155
    %s156 = sphi 0, %s153
    %s157 = sphi 0, %s156
    %s173 = sphi 0, %s157
  $region4: #{a_call__.2} parent=0 // loop_header_branch
    %17 = sbr.rel (%p15) target = $region8
  $region5: #{a_call__.2} parent=0 // loop_body
    %s19 = ssub.s32 %s14, 1
    %s20 = ssub.s32 %s14, 2
    %s27 = sadd.s32 1, %s22
    %p28 = scmp.ge.s32.totalorder %s27, 1
    %s29 = scalar_select %p28, 0, %s27
    %s30 = sadd.s32 1, %s21
    %s31 = scalar_select %p28, %s30, %s21
    %p32 = scmp.ge.s32.totalorder %s31, 2
    %s33 = scalar_select %p32, 0, %s31
    %s34 = ssub.s32 %s21, %s33
    %p35 = scmp.eq.s32.totalorder %s34, 0
    %s37 = sadd.s32 %s36, 1
    %s38 = scalar_select %p35, %s36, %s37
    %p41 = pneg %p35
    %p42 = scmp.eq.s32.totalorder %s14, 1
    %p43 = por %p41, %p42
    %p44 = scmp.ne.s32.totalorder %s36, %s39
    %p45 = scmp.eq.s32.totalorder %s14, 0
    %p46 = por %p44, %p45
    %p47 = scmp.ne.s32.totalorder %s36, %s39
    %p48 = scmp.eq.s32.totalorder %s19, 1
    %p49 = por %p47, %p48
    %p50 = scmp.ne.s32.totalorder %s39, %s40
    %p51 = scmp.eq.s32.totalorder %s19, 0
    %p52 = por %p50, %p51
    %p53 = scmp.ne.s32.totalorder %s39, %s40
    %p54 = scmp.eq.s32.totalorder %s20, 1
    %p55 = por %p53, %p54
    %p57 = scmp.ne.s32.totalorder %s40, %s56
    %p58 = scmp.eq.s32.totalorder %s20, 0
    %p59 = por %p57, %p58
    %s61 = sadd.s32 %s60, 1
    %p64 = scmp.eq.s32.totalorder %s14, 1
    %p65 = scmp.ne.s32.totalorder %s60, %s62
    %p66 = scmp.eq.s32.totalorder %s14, 0
    %p67 = por %p65, %p66
    %p68 = scmp.ne.s32.totalorder %s60, %s62
    %p69 = scmp.eq.s32.totalorder %s19, 1
    %p70 = por %p68, %p69
    %p71 = scmp.ne.s32.totalorder %s62, %s63
    %p72 = scmp.eq.s32.totalorder %s19, 0
    %p73 = por %p71, %p72
    %p74 = scmp.ne.s32.totalorder %s62, %s63
    %p75 = scmp.eq.s32.totalorder %s20, 1
    %p76 = por %p74, %p75
    %p78 = scmp.ne.s32.totalorder %s63, %s77
    %p79 = scmp.eq.s32.totalorder %s20, 0
    %p80 = por %p78, %p79
    %s82 = sadd.s32 %s81, 1
    %p85 = scmp.eq.s32.totalorder %s14, 1
    %p86 = scmp.ne.s32.totalorder %s81, %s83
    %p87 = scmp.eq.s32.totalorder %s14, 0
    %p88 = por %p86, %p87
    %p89 = scmp.ne.s32.totalorder %s81, %s83
    %p90 = scmp.eq.s32.totalorder %s19, 1
    %p91 = por %p89, %p90
    %p92 = scmp.ne.s32.totalorder %s83, %s84
    %p93 = scmp.eq.s32.totalorder %s19, 0
    %p94 = por %p92, %p93
    %p95 = scmp.ne.s32.totalorder %s83, %s84
    %p96 = scmp.eq.s32.totalorder %s20, 1
    %p97 = por %p95, %p96
    %p99 = scmp.ne.s32.totalorder %s84, %s98
    %p100 = scmp.eq.s32.totalorder %s20, 0
    %p101 = por %p99, %p100
    %s103 = sadd.s32 %s102, 1
    %p106 = scmp.eq.s32.totalorder %s14, 1
    %p107 = scmp.ne.s32.totalorder %s102, %s104
    %p108 = scmp.eq.s32.totalorder %s14, 0
    %p109 = por %p107, %p108
    %p110 = scmp.ne.s32.totalorder %s102, %s104
    %p111 = scmp.eq.s32.totalorder %s19, 1
    %p112 = por %p110, %p111
    %p113 = scmp.ne.s32.totalorder %s104, %s105
    %p114 = scmp.eq.s32.totalorder %s19, 0
    %p115 = por %p113, %p114
    %p116 = scmp.ne.s32.totalorder %s104, %s105
    %p117 = scmp.eq.s32.totalorder %s20, 1
    %p118 = por %p116, %p117
    %p120 = scmp.ne.s32.totalorder %s105, %s119
    %p121 = scmp.eq.s32.totalorder %s20, 0
    %p122 = por %p120, %p121
    %s123 = ssub.s32 %s21, %s33
    %s124 = ssub.s32 %s22, %s29
    %s125 = sor.u32 %s123, %s124
    %p126 = scmp.eq.s32.totalorder %s125, 0
    %s128 = sadd.s32 %s127, 1
    %s129 = scalar_select %p126, %s127, %s128
    %p132 = pneg %p126
    %p133 = scmp.eq.s32.totalorder %s14, 1
    %p134 = por %p132, %p133
    %p135 = scmp.ne.s32.totalorder %s127, %s130
    %p136 = scmp.eq.s32.totalorder %s14, 0
    %p137 = por %p135, %p136
    %p138 = scmp.ne.s32.totalorder %s127, %s130
    %p139 = scmp.eq.s32.totalorder %s19, 1
    %p140 = por %p138, %p139
    %p141 = scmp.ne.s32.totalorder %s130, %s131
    %p142 = scmp.eq.s32.totalorder %s19, 0
    %p143 = por %p141, %p142
    %p144 = scmp.ne.s32.totalorder %s130, %s131
    %p145 = scmp.eq.s32.totalorder %s20, 1
    %p146 = por %p144, %p145
    %p148 = scmp.ne.s32.totalorder %s131, %s147
    %p149 = scmp.eq.s32.totalorder %s20, 0
    %p150 = por %p148, %p149
    %s151 = ssub.s32 %s21, %s33
    %p152 = scmp.eq.s32.totalorder %s151, 0
    %s154 = sadd.s32 %s153, 1
    %s155 = scalar_select %p152, %s153, %s154
    %p158 = pneg %p152
    %p159 = scmp.eq.s32.totalorder %s14, 1
    %p160 = por %p158, %p159
    %p161 = scmp.ne.s32.totalorder %s153, %s156
    %p162 = scmp.eq.s32.totalorder %s14, 0
    %p163 = por %p161, %p162
    %p164 = scmp.ne.s32.totalorder %s153, %s156
    %p165 = scmp.eq.s32.totalorder %s19, 1
    %p166 = por %p164, %p165
    %p167 = scmp.ne.s32.totalorder %s156, %s157
    %p168 = scmp.eq.s32.totalorder %s19, 0
    %p169 = por %p167, %p168
    %p170 = scmp.ne.s32.totalorder %s156, %s157
    %p171 = scmp.eq.s32.totalorder %s20, 1
    %p172 = por %p170, %p171
    %p174 = scmp.ne.s32.totalorder %s157, %s173
    %p175 = scmp.eq.s32.totalorder %s20, 0
    %p176 = por %p174, %p175
    %p177 = scmp.le.s32.totalorder 1, %s14
    %p178 = scmp.lt.s32.totalorder %s14, 3
    %p179 = pnand %p177, %p178
    %p180 = pneg %p179
    // Predicated region
    $region9: #{a_call__.2} parent=5 // pred_check
      _
    $region10: #{a_call__.2} parent=5 // pred_check_branch
      %182 = sbr.rel (%p179) target = $region12
    $region11: #{a_call__.2} parent=5 // pred_region
      %s183 = ssub.s32 %s14, 1
      // Predicated region
      $region13: #{a_call__.2} parent=11 // pred_check
        %p184 = pneg %p73
      $region14: #{a_call__.2} parent=11 // pred_check_branch
        %186 = sbr.rel (%p184) target = $region16
      $region15: #{a_call__.2} parent=11 // pred_region
        _
      $region16: #{a_call__.2} parent=11 // pred_fallthru
        _
      // Predicated region
      $region17: #{a_call__.2} parent=11 // pred_check
        %p187 = pneg %p94
      $region18: #{a_call__.2} parent=11 // pred_check_branch
        %189 = sbr.rel (%p187) target = $region20
      $region19: #{a_call__.2} parent=11 // pred_region
        _
      $region20: #{a_call__.2} parent=11 // pred_fallthru
        _
      // Predicated region
      $region21: #{a_call__.2} parent=11 // pred_check
        %p190 = pneg %p115
      $region22: #{a_call__.2} parent=11 // pred_check_branch
        %192 = sbr.rel (%p190) target = $region24
      $region23: #{a_call__.2} parent=11 // pred_region
        _
      $region24: #{a_call__.2} parent=11 // pred_fallthru
        _
    $region12: #{a_call__.2} parent=5 // pred_fallthru
      _
    %p193 = scmp.lt.s32.totalorder %s14, 2
    // Predicated region
    $region25: #{a_call__.2} parent=5 // pred_check
      %p194 = pneg %p193
    $region26: #{a_call__.2} parent=5 // pred_check_branch
      %196 = sbr.rel (%p194) target = $region28
    $region27: #{a_call__.2} parent=5 // pred_region
      // Predicated region
      $region29: #{a_call__.2} parent=27 // pred_check
        %p197 = pneg %p46
      $region30: #{a_call__.2} parent=27 // pred_check_branch
        %199 = sbr.rel (%p197) target = $region32
      $region31: #{a_call__.2} parent=27 // pred_region
        %p200 = scmp.lt.s32.totalorder %s21, 1
        %s201 = scalar_select %p200, %s21, 1
        %s202 = smul.addr %s201, 8
        %s203 = scalar_lea.vmem %s0, %s202
      $region32: #{a_call__.2} parent=27 // pred_fallthru
        _
    $region28: #{a_call__.2} parent=5 // pred_fallthru
      _
    %p204 = scmp.le.s32.totalorder 1, %s14
    %p205 = scmp.lt.s32.totalorder %s14, 3
    %p206 = pnand %p204, %p205
    %p207 = pneg %p206
    // Predicated region
    $region33: #{a_call__.2} parent=5 // pred_check
      _
    $region34: #{a_call__.2} parent=5 // pred_check_branch
      %209 = sbr.rel (%p206) target = $region36
    $region35: #{a_call__.2} parent=5 // pred_region
      %s210 = ssub.s32 %s14, 1
      %p211 = scmp.lt.s32.totalorder %s23, 1
      %s212 = scalar_select %p211, %s23, 1
      %s213 = smul.addr %s212, 8
      %s214 = scalar_lea.vmem %s0, %s213
      %p215 = pneg %p52
      %p216 = pneg %p49
      %p217 = pneg %p73
      %p218 = pneg %p70
      %p219 = pneg %p94
      %p220 = pneg %p91
      %p221 = pneg %p115
      %p222 = pneg %p112
      %p223 = pneg %p143
      %p224 = pneg %p140
      %p225 = scmp.lt.s32.totalorder %s23, 1
      %s226 = scalar_select %p225, %s23, 1
      %p227 = scmp.lt.s32.totalorder %s24, 0
      %s228 = scalar_select %p227, %s24, 0
      %s229 = sadd.s32 %s228, %s226
      %s230 = smul.addr %s229, 8
      %s231 = scalar_lea.vmem %s4, %s230
      %p232 = pneg %p169
      %p233 = pneg %p166
      %p234 = scmp.lt.s32.totalorder %s23, 1
      %s235 = scalar_select %p234, %s23, 1
      %s236 = scalar_lea.vmem %s5, %s235
      %p237 = scmp.lt.s32.totalorder %s23, 1
      %s238 = scalar_select %p237, %s23, 1
      %s239 = smul.addr %s238, 8
      %s240 = scalar_lea.vmem %s0, %s239
      %p241 = scmp.lt.s32.totalorder %s23, 1
      %s242 = scalar_select %p241, %s23, 1
      %p243 = scmp.lt.s32.totalorder %s24, 0
      %s244 = scalar_select %p243, %s24, 0
      %s245 = sadd.s32 %s244, %s242
      %s246 = smul.addr %s245, 8
      %s247 = scalar_lea.vmem %s4, %s246
      %p248 = scmp.lt.s32.totalorder %s23, 1
      %s249 = scalar_select %p248, %s23, 1
      %s250 = scalar_lea.vmem %s5, %s249
      %s251 = smul.u32 %s24, 8
      %p252 = scmp.eq.s32.totalorder %s24, 0
      // Predicated region
      $region37: #{a_call__.2} parent=35 // pred_check
        %p253 = pneg %p252
      $region38: #{a_call__.2} parent=35 // pred_check_branch
        %255 = sbr.rel (%p253) target = $region40
      $region39: #{a_call__.2} parent=35 // pred_region
        %256 = vst [vmem:[#allocation2] sm:$0xff] 0.0
        %257 = vst [vmem:[#allocation2 + $0x10] sm:$0xff] 0.0
        %v258 = vld [vmem:[%s240] sm:$0xff]
        %259 = vst [vmem:[#allocation2 + $0x8] sm:$0xff] %v258
      $region40: #{a_call__.2} parent=35 // pred_fallthru
        _
      %s260 = scalar_lea.vmem [#allocation2], %s251
      %v261 = vld [vmem:[%s260] sm:$0xff]
      %v262 = vld [vmem:[%s260 + $0x8] sm:$0xff]
      %v263 = vld [vmem:[%s260 + $0x10] sm:$0xff]
      %v264 = vld [vmem:[%s1] sm:$0xff]
      %v265 = vld [vmem:[%s1 + $0x8] sm:$0xff]
      %v266 = vld [vmem:[%s1 + $0x10] sm:$0xff]
      %v267 = vld [vmem:[%s1 + $0x18] sm:$0xff]
      %v268 = vld [vmem:[%s1 + $0x20] sm:$0xff]
      %v269 = vld [vmem:[%s1 + $0x28] sm:$0xff]
      %v270 = vld [vmem:[%s1 + $0x30] sm:$0xff]
      %v271 = vld [vmem:[%s1 + $0x38] sm:$0xff]
      %v272 = vld [vmem:[%s1 + $0x40] sm:$0xff]
      %v273 = vld [vmem:[%s1 + $0x48] sm:$0xff]
      %v274 = vld [vmem:[%s1 + $0x50] sm:$0xff]
      %v275 = vld [vmem:[%s1 + $0x58] sm:$0xff]
      %v276 = vld [vmem:[%s1 + $0x60] sm:$0xff]
      %v277 = vld [vmem:[%s1 + $0x68] sm:$0xff]
      %v278 = vld [vmem:[%s1 + $0x70] sm:$0xff]
      %v279 = vld [vmem:[%s1 + $0x78] sm:$0xff]
      %s280 = scalar_lea.vmem %s1, 128
      %v281 = vld [vmem:[%s280] sm:$0xff]
      %v282 = vld [vmem:[%s280 + $0x8] sm:$0xff]
      %v283 = vld [vmem:[%s280 + $0x10] sm:$0xff]
      %v284 = vld [vmem:[%s280 + $0x18] sm:$0xff]
      %v285 = vld [vmem:[%s280 + $0x20] sm:$0xff]
      %v286 = vld [vmem:[%s280 + $0x28] sm:$0xff]
      %v287 = vld [vmem:[%s280 + $0x30] sm:$0xff]
      %v288 = vld [vmem:[%s280 + $0x38] sm:$0xff]
      %v289 = vld [vmem:[%s280 + $0x40] sm:$0xff]
      %v290 = vld [vmem:[%s280 + $0x48] sm:$0xff]
      %v291 = vld [vmem:[%s280 + $0x50] sm:$0xff]
      %v292 = vld [vmem:[%s280 + $0x58] sm:$0xff]
      %v293 = vld [vmem:[%s280 + $0x60] sm:$0xff]
      %v294 = vld [vmem:[%s280 + $0x68] sm:$0xff]
      %v295 = vld [vmem:[%s280 + $0x70] sm:$0xff]
      %v296 = vld [vmem:[%s280 + $0x78] sm:$0xff]
      %297 = vmatprep.subr.mxu0 0.0
      %298 = vmatpush1.msra.mxu0 %v296
      %299 = vmatprep.subr.mxu0 0.0
      %300 = vmatpush1.msra.mxu0 %v295
      %301 = vmatprep.subr.mxu0 0.0
      %302 = vmatpush1.msra.mxu0 %v294
      %303 = vmatprep.subr.mxu0 0.0
      %304 = vmatpush1.msra.mxu0 %v293
      %305 = vmatprep.subr.mxu0 0.0
      %306 = vmatpush1.msra.mxu0 %v292
      %307 = vmatprep.subr.mxu0 0.0
      %308 = vmatpush1.msra.mxu0 %v291
      %309 = vmatprep.subr.mxu0 0.0
      %310 = vmatpush1.msra.mxu0 %v290
      %311 = vmatprep.subr.mxu0 0.0
      %312 = vmatpush1.msra.mxu0 %v289
      %313 = vmatprep.subr.mxu0 0.0
      %314 = vmatpush1.msra.mxu0 %v288
      %315 = vmatprep.subr.mxu0 0.0
      %316 = vmatpush1.msra.mxu0 %v287
      %317 = vmatprep.subr.mxu0 0.0
      %318 = vmatpush1.msra.mxu0 %v286
      %319 = vmatprep.subr.mxu0 0.0
      %320 = vmatpush1.msra.mxu0 %v285
      %321 = vmatprep.subr.mxu0 0.0
      %322 = vmatpush1.msra.mxu0 %v284
      %323 = vmatprep.subr.mxu0 0.0
      %324 = vmatpush1.msra.mxu0 %v283
      %325 = vmatprep.subr.mxu0 0.0
      %326 = vmatpush1.msra.mxu0 %v282
      %327 = vmatprep.subr.mxu0 0.0
      %328 = vmatpush1.msra.mxu0 %v281
      %329 = vmatprep.subr.mxu0 0.0
      %330 = vmatpush2.msra.mxu0 0.0
      %331 = vmatprep.subr.mxu0 0.0
      %332 = vmatpush2.msra.mxu0 0.0
      %333 = vmatprep.subr.mxu0 0.0
      %334 = vmatpush2.msra.mxu0 0.0
      %335 = vmatprep.subr.mxu0 0.0
      %336 = vmatpush2.msra.mxu0 0.0
      %337 = vmatprep.subr.mxu0 0.0
      %338 = vmatpush2.msra.mxu0 0.0
      %339 = vmatprep.subr.mxu0 0.0
      %340 = vmatpush2.msra.mxu0 0.0
      %341 = vmatprep.subr.mxu0 0.0
      %342 = vmatpush2.msra.mxu0 0.0
      %343 = vmatprep.subr.mxu0 0.0
      %344 = vmatpush2.msra.mxu0 0.0
      %345 = vmatprep.subr.mxu0 0.0
      %346 = vmatpush2.msra.mxu0 0.0
      %347 = vmatprep.subr.mxu0 0.0
      %348 = vmatpush2.msra.mxu0 0.0
      %349 = vmatprep.subr.mxu0 0.0
      %350 = vmatpush2.msra.mxu0 0.0
      %351 = vmatprep.subr.mxu0 0.0
      %352 = vmatpush2.msra.mxu0 0.0
      %353 = vmatprep.subr.mxu0 0.0
      %354 = vmatpush2.msra.mxu0 0.0
      %355 = vmatprep.subr.mxu0 0.0
      %356 = vmatpush2.msra.mxu0 0.0
      %357 = vmatprep.subr.mxu0 0.0
      %358 = vmatpush2.msra.mxu0 0.0
      %359 = vmatprep.subr.mxu0 0.0
      %360 = vmatpush2.msra.mxu0 0.0
      %361 = vmatprep.mubr.f32.mxu0 0.0
      %362 = vmatmul.mubr.f32.gmra.mxu0 %v262
      %v363 = vpop.f32.mrf.mxu0
      %v364 = vadd.f32 0.0, %v363
      %v365 = vpop.f32.mrf.mxu0
      %366 = vdwg.mxu0
      %vm369 = vcmask 1040384
      %v370 = vrot.slane %v261, 7
      %v371 = vrot.slane %v262, 7
      %v372 = vsel %vm369, %v370, %v371
      %374 = vmatprep.subr.mxu0 0.0
      %375 = vmatpush1.msra.mxu0 %v279
      %376 = vmatprep.subr.mxu0 0.0
      %377 = vmatpush1.msra.mxu0 %v278
      %378 = vmatprep.subr.mxu0 0.0
      %379 = vmatpush1.msra.mxu0 %v277
      %380 = vmatprep.subr.mxu0 0.0
      %381 = vmatpush1.msra.mxu0 %v276
      %382 = vmatprep.subr.mxu0 0.0
      %383 = vmatpush1.msra.mxu0 %v275
      %384 = vmatprep.subr.mxu0 0.0
      %385 = vmatpush1.msra.mxu0 %v274
      %386 = vmatprep.subr.mxu0 0.0
      %387 = vmatpush1.msra.mxu0 %v273
      %388 = vmatprep.subr.mxu0 0.0
      %389 = vmatpush1.msra.mxu0 %v272
      %390 = vmatprep.subr.mxu0 0.0
      %391 = vmatpush1.msra.mxu0 %v271
      %392 = vmatprep.subr.mxu0 0.0
      %393 = vmatpush1.msra.mxu0 %v270
      %394 = vmatprep.subr.mxu0 0.0
      %395 = vmatpush1.msra.mxu0 %v269
      %396 = vmatprep.subr.mxu0 0.0
      %397 = vmatpush1.msra.mxu0 %v268
      %398 = vmatprep.subr.mxu0 0.0
      %399 = vmatpush1.msra.mxu0 %v267
      %400 = vmatprep.subr.mxu0 0.0
      %401 = vmatpush1.msra.mxu0 %v266
      %402 = vmatprep.subr.mxu0 0.0
      %403 = vmatpush1.msra.mxu0 %v265
      %404 = vmatprep.subr.mxu0 0.0
      %405 = vmatpush1.msra.mxu0 %v264
      %406 = vmatprep.subr.mxu0 0.0
      %407 = vmatpush2.msra.mxu0 0.0
      %408 = vmatprep.subr.mxu0 0.0
      %409 = vmatpush2.msra.mxu0 0.0
      %410 = vmatprep.subr.mxu0 0.0
      %411 = vmatpush2.msra.mxu0 0.0
      %412 = vmatprep.subr.mxu0 0.0
      %413 = vmatpush2.msra.mxu0 0.0
      %414 = vmatprep.subr.mxu0 0.0
      %415 = vmatpush2.msra.mxu0 0.0
      %416 = vmatprep.subr.mxu0 0.0
      %417 = vmatpush2.msra.mxu0 0.0
      %418 = vmatprep.subr.mxu0 0.0
      %419 = vmatpush2.msra.mxu0 0.0
      %420 = vmatprep.subr.mxu0 0.0
      %421 = vmatpush2.msra.mxu0 0.0
      %422 = vmatprep.subr.mxu0 0.0
      %423 = vmatpush2.msra.mxu0 0.0
      %424 = vmatprep.subr.mxu0 0.0
      %425 = vmatpush2.msra.mxu0 0.0
      %426 = vmatprep.subr.mxu0 0.0
      %427 = vmatpush2.msra.mxu0 0.0
      %428 = vmatprep.subr.mxu0 0.0
      %429 = vmatpush2.msra.mxu0 0.0
      %430 = vmatprep.subr.mxu0 0.0
      %431 = vmatpush2.msra.mxu0 0.0
      %432 = vmatprep.subr.mxu0 0.0
      %433 = vmatpush2.msra.mxu0 0.0
      %434 = vmatprep.subr.mxu0 0.0
      %435 = vmatpush2.msra.mxu0 0.0
      %436 = vmatprep.subr.mxu0 0.0
      %437 = vmatpush2.msra.mxu0 0.0
      %438 = vmatprep.mubr.f32.mxu0 0.0
      %439 = vmatmul.mubr.f32.gmra.mxu0 %v372
      %v440 = vpop.f32.mrf.mxu0
      %v441 = vadd.f32 %v364, %v440
      %v442 = vpop.f32.mrf.mxu0
      %443 = vdwg.mxu0
      %s444 = scalar_lea.vmem %s1, 256
      %v445 = vld [vmem:[%s444] sm:$0xff]
      %v446 = vld [vmem:[%s444 + $0x8] sm:$0xff]
      %v447 = vld [vmem:[%s444 + $0x10] sm:$0xff]
      %v448 = vld [vmem:[%s444 + $0x18] sm:$0xff]
      %v449 = vld [vmem:[%s444 + $0x20] sm:$0xff]
      %v450 = vld [vmem:[%s444 + $0x28] sm:$0xff]
      %v451 = vld [vmem:[%s444 + $0x30] sm:$0xff]
      %v452 = vld [vmem:[%s444 + $0x38] sm:$0xff]
      %v453 = vld [vmem:[%s444 + $0x40] sm:$0xff]
      %v454 = vld [vmem:[%s444 + $0x48] sm:$0xff]
      %v455 = vld [vmem:[%s444 + $0x50] sm:$0xff]
      %v456 = vld [vmem:[%s444 + $0x58] sm:$0xff]
      %v457 = vld [vmem:[%s444 + $0x60] sm:$0xff]
      %v458 = vld [vmem:[%s444 + $0x68] sm:$0xff]
      %v459 = vld [vmem:[%s444 + $0x70] sm:$0xff]
      %v460 = vld [vmem:[%s444 + $0x78] sm:$0xff]
      %vm462 = vcmask 1046528
      %v463 = vrot.slane %v262, 1
      %v464 = vrot.slane %v263, 1
      %v465 = vsel %vm462, %v463, %v464
      %467 = vmatprep.subr.mxu0 0.0
      %468 = vmatpush1.msra.mxu0 %v460
      %469 = vmatprep.subr.mxu0 0.0
      %470 = vmatpush1.msra.mxu0 %v459
      %471 = vmatprep.subr.mxu0 0.0
      %472 = vmatpush1.msra.mxu0 %v458
      %473 = vmatprep.subr.mxu0 0.0
      %474 = vmatpush1.msra.mxu0 %v457
      %475 = vmatprep.subr.mxu0 0.0
      %476 = vmatpush1.msra.mxu0 %v456
      %477 = vmatprep.subr.mxu0 0.0
      %478 = vmatpush1.msra.mxu0 %v455
      %479 = vmatprep.subr.mxu0 0.0
      %480 = vmatpush1.msra.mxu0 %v454
      %481 = vmatprep.subr.mxu0 0.0
      %482 = vmatpush1.msra.mxu0 %v453
      %483 = vmatprep.subr.mxu0 0.0
      %484 = vmatpush1.msra.mxu0 %v452
      %485 = vmatprep.subr.mxu0 0.0
      %486 = vmatpush1.msra.mxu0 %v451
      %487 = vmatprep.subr.mxu0 0.0
      %488 = vmatpush1.msra.mxu0 %v450
      %489 = vmatprep.subr.mxu0 0.0
      %490 = vmatpush1.msra.mxu0 %v449
      %491 = vmatprep.subr.mxu0 0.0
      %492 = vmatpush1.msra.mxu0 %v448
      %493 = vmatprep.subr.mxu0 0.0
      %494 = vmatpush1.msra.mxu0 %v447
      %495 = vmatprep.subr.mxu0 0.0
      %496 = vmatpush1.msra.mxu0 %v446
      %497 = vmatprep.subr.mxu0 0.0
      %498 = vmatpush1.msra.mxu0 %v445
      %499 = vmatprep.subr.mxu0 0.0
      %500 = vmatpush2.msra.mxu0 0.0
      %501 = vmatprep.subr.mxu0 0.0
      %502 = vmatpush2.msra.mxu0 0.0
      %503 = vmatprep.subr.mxu0 0.0
      %504 = vmatpush2.msra.mxu0 0.0
      %505 = vmatprep.subr.mxu0 0.0
      %506 = vmatpush2.msra.mxu0 0.0
      %507 = vmatprep.subr.mxu0 0.0
      %508 = vmatpush2.msra.mxu0 0.0
      %509 = vmatprep.subr.mxu0 0.0
      %510 = vmatpush2.msra.mxu0 0.0
      %511 = vmatprep.subr.mxu0 0.0
      %512 = vmatpush2.msra.mxu0 0.0
      %513 = vmatprep.subr.mxu0 0.0
      %514 = vmatpush2.msra.mxu0 0.0
      %515 = vmatprep.subr.mxu0 0.0
      %516 = vmatpush2.msra.mxu0 0.0
      %517 = vmatprep.subr.mxu0 0.0
      %518 = vmatpush2.msra.mxu0 0.0
      %519 = vmatprep.subr.mxu0 0.0
      %520 = vmatpush2.msra.mxu0 0.0
      %521 = vmatprep.subr.mxu0 0.0
      %522 = vmatpush2.msra.mxu0 0.0
      %523 = vmatprep.subr.mxu0 0.0
      %524 = vmatpush2.msra.mxu0 0.0
      %525 = vmatprep.subr.mxu0 0.0
      %526 = vmatpush2.msra.mxu0 0.0
      %527 = vmatprep.subr.mxu0 0.0
      %528 = vmatpush2.msra.mxu0 0.0
      %529 = vmatprep.subr.mxu0 0.0
      %530 = vmatpush2.msra.mxu0 0.0
      %531 = vmatprep.mubr.f32.mxu0 0.0
      %532 = vmatmul.mubr.f32.gmra.mxu0 %v465
      %v533 = vpop.f32.mrf.mxu0
      %v534 = vadd.f32 0.0, %v533
      %v535 = vpop.f32.mrf.mxu0
      %536 = vdwg.mxu0
      %v537 = vadd.f32 %v441, %v534
      %v538 = vld [vmem:[#allocation3] sm:$0x1]
      %v540 = vlaneseq
      %v541 = vshrl.u32 %v540, 7
      %v542 = vsub.s32 0, %v541
      %v543 = vrot.slane %v538, %v542
      %544 = vset.pattern.permute.xlu0 0
      %545 = vperm.xlu0 %544, %v543
      %v546 = vpop.permute.xlu0 %545
      %v548 = vmul.f32 %v537, %v546
      %v549 = vld [vmem:[%s2] sm:$0x1]
      %v551 = vlaneseq
      %v552 = vshrl.u32 %v551, 7
      %v553 = vsub.s32 0, %v552
      %v554 = vrot.slane %v549, %v553
      %v556 = vadd.f32 %v548, %v554
      %v557 = vmax.f32 %v556, 0.0
      %v558 = vadd.f32 %v557, 0.0
      %s559 = scalar_lea.vmem %s240, %s251
      %v560 = vld [vmem:[%s559] sm:$0xff]
      %v561 = vadd.f32 %v558, %v560
      %562 = vst [vmem:[%s247] sm:$0xff] %v561
      // Predicated region
      $region41: #{a_call__.2} parent=35 // pred_check
        %p563 = pneg %p252
      $region42: #{a_call__.2} parent=35 // pred_check_branch
        %565 = sbr.rel (%p563) target = $region44
      $region43: #{a_call__.2} parent=35 // pred_region
        %566 = vst [vmem:[%s250] sm:$0x1] 0.0
      $region44: #{a_call__.2} parent=35 // pred_fallthru
        _
      %v567 = vld [vmem:[%s250] sm:$0x1]
      %v568 = vmul.f32 %v561, %v561
      %v569 = vrot.slane %v568, 4
      %v570 = vadd.f32 %v568, %v569
      %v571 = vrot.slane %v570, 2
      %v572 = vadd.f32 %v570, %v571
      %v573 = vrot.slane %v572, 1
      %v574 = vadd.f32 %v572, %v573
      %v575 = vadd.f32 %v567, %v574
      %576 = vst [vmem:[%s250] sm:$0x1] %v575
      %p577 = scmp.lt.s32.totalorder %s23, 1
      %s578 = scalar_select %p577, %s23, 1
      %p579 = scmp.lt.s32.totalorder %s24, 0
      %s580 = scalar_select %p579, %s24, 0
      %s581 = sadd.s32 %s580, %s578
      %s582 = smul.addr %s581, 8
      %s583 = scalar_lea.vmem %s4, %s582
      %p584 = scmp.lt.s32.totalorder %s23, 1
      %s585 = scalar_select %p584, %s23, 1
      %s586 = scalar_lea.vmem %s5, %s585
      // Predicated region
      $region45: #{a_call__.2} parent=35 // pred_check
        %p587 = pneg %p140
      $region46: #{a_call__.2} parent=35 // pred_check_branch
        %589 = sbr.rel (%p587) target = $region48
      $region47: #{a_call__.2} parent=35 // pred_region
        _
      $region48: #{a_call__.2} parent=35 // pred_fallthru
        _
      // Predicated region
      $region49: #{a_call__.2} parent=35 // pred_check
        %p590 = pneg %p166
      $region50: #{a_call__.2} parent=35 // pred_check_branch
        %592 = sbr.rel (%p590) target = $region52
      $region51: #{a_call__.2} parent=35 // pred_region
        _
      $region52: #{a_call__.2} parent=35 // pred_fallthru
        _
    $region36: #{a_call__.2} parent=5 // pred_fallthru
      _
    %p593 = scmp.le.s32.totalorder 2, %s14
    // Predicated region
    $region53: #{a_call__.2} parent=5 // pred_check
      %p594 = pneg %p593
    $region54: #{a_call__.2} parent=5 // pred_check_branch
      %596 = sbr.rel (%p594) target = $region56
    $region55: #{a_call__.2} parent=5 // pred_region
      %s597 = ssub.s32 %s14, 2
      // Predicated region
      $region57: #{a_call__.2} parent=55 // pred_check
        %p598 = pneg %p146
      $region58: #{a_call__.2} parent=55 // pred_check_branch
        %600 = sbr.rel (%p598) target = $region60
      $region59: #{a_call__.2} parent=55 // pred_region
        %p601 = scmp.lt.s32.totalorder %s25, 1
        %s602 = scalar_select %p601, %s25, 1
        %p603 = scmp.lt.s32.totalorder %s26, 0
        %s604 = scalar_select %p603, %s26, 0
        %s605 = sadd.s32 %s604, %s602
        %s606 = smul.addr %s605, 8
        %s607 = scalar_lea.vmem %s4, %s606
      $region60: #{a_call__.2} parent=55 // pred_fallthru
        _
      // Predicated region
      $region61: #{a_call__.2} parent=55 // pred_check
        %p608 = pneg %p172
      $region62: #{a_call__.2} parent=55 // pred_check_branch
        %610 = sbr.rel (%p608) target = $region64
      $region63: #{a_call__.2} parent=55 // pred_region
        %p611 = scmp.lt.s32.totalorder %s25, 1
        %s612 = scalar_select %p611, %s25, 1
        %s613 = scalar_lea.vmem %s5, %s612
      $region64: #{a_call__.2} parent=55 // pred_fallthru
        _
    $region56: #{a_call__.2} parent=5 // pred_fallthru
      _
  $region6: #{a_call__.2} parent=0 // loop_footer
    %s18 = sadd.s32 1, %s14
  $region7: #{a_call__.2} parent=0 // loop_footer_branch
    %13 = sbr.rel target = $region3
  $region8: #{a_call__.2} parent=0 // loop_exit
    _

// kernel: a_call__.3
$region0: #{a_call__.3}
  #allocation0 [shape = 'u32[]', space=smem, size = 0x4, offset = 0x4, fixed_abs, tag = 'smem constant byte address 0x4 - core index']
  #allocation1 [shape = 'u32[144,128]{1,0:T(1,128)}', space=vmem, size = 0x12000, scoped, tag = 'internal scratch']
  #allocation2 [shape = 'f32[24,128]{1,0:T(8,128)}', space=vmem, size = 0x3000, scoped, tag = 'scratch operand']
  #allocation3 [shape = 'f32[24,128]{1,0:T(8,128)}', space=vmem, size = 0x3000, scoped, tag = 'scratch operand']
  #allocation4 [shape = 'f32[1,1]{1,0:T(1,128)S(1)}', space=vmem, size = 0x200, scoped, tag = 'scoped memory for a_call__.3']
  #allocation5 [shape = 'f32[1,1]{1,0:T(1,128)S(1)}', space=vmem, size = 0x200, scoped, tag = 'scoped memory for a_call__.3']
  %s0 = inlined_call_operand.vmem [shape: f32[2,8,128], index: 0, kind: input, shape index: {}]
  %s1 = inlined_call_operand.vmem [shape: f32[3,128,128], index: 1, kind: input, shape index: {}]
  %s2 = inlined_call_operand.vmem [shape: f32[1,128], index: 2, kind: input, shape index: {}]
  %s3 = inlined_call_operand.<no memory space> [shape: f32[1,1], index: 3, kind: input, shape index: {}]
  %s4 = inlined_call_operand.vmem [shape: f32[2,8,128], index: 4, kind: input, shape index: {}]
  %s5 = inlined_call_operand.vmem [shape: f32[3,128,128], index: 5, kind: input, shape index: {}]
  %s6 = inlined_call_operand.vmem [shape: f32[1,128], index: 6, kind: input, shape index: {}]
  %s7 = inlined_call_operand.<no memory space> [shape: f32[1,1], index: 7, kind: input, shape index: {}]
  %s8 = inlined_call_operand.vmem [shape: f32[2,8,128], index: 8, kind: output, shape index: {0}]
  %s9 = inlined_call_operand.vmem [shape: f32[2,1,128], index: 9, kind: output, shape index: {1}]
  %10 = xla_tuple %s8, %s9
  %s11 = sld [smem:[#allocation0]]
  $region81: #{a_call__.3} parent=0
    _
  %s13 = ssub.s32 1, %s11
  %s14 = scalar_select 0, %s13, %s11
  %v15 = vstv %s3
  %16 = vst [vmem:[#allocation4] sm:$0x1] %v15
  %v17 = vstv %s7
  %18 = vst [vmem:[#allocation5] sm:$0x1] %v17
  loop: start=0, step=1, limit=4
  $region2: #{a_call__.3} parent=0 // loop_pre_header
    _
  $region3: #{a_call__.3} parent=0 // loop_header
    %s20 = sphi 0, %s24
    %p21 = scmp.ge.s32.totalorder %s20, 4
    %s27 = sphi 0, %s39
    %s28 = sphi 0, %s35
    %s29 = sphi 0, %s27
    %s30 = sphi 0, %s28
    %s31 = sphi 0, %s29
    %s32 = sphi 0, %s30
    %s42 = sphi 0, %s44
    %s45 = sphi 0, %s42
    %s46 = sphi 0, %s45
    %s62 = sphi 0, %s46
    %s66 = sphi 0, %s66
    %s68 = sphi 0, %s66
    %s69 = sphi 0, %s68
    %s83 = sphi 0, %s69
    %s87 = sphi 0, %s87
    %s89 = sphi 0, %s87
    %s90 = sphi 0, %s89
    %s104 = sphi 0, %s90
    %s108 = sphi 0, %s108
    %s110 = sphi 0, %s108
    %s111 = sphi 0, %s110
    %s125 = sphi 0, %s111
    %s131 = sphi 0, %s133
    %s134 = sphi 0, %s131
    %s135 = sphi 0, %s134
    %s151 = sphi 0, %s135
    %s155 = sphi 0, %s155
    %s157 = sphi 0, %s155
    %s158 = sphi 0, %s157
    %s172 = sphi 0, %s158
    %s176 = sphi 0, %s176
    %s178 = sphi 0, %s176
    %s179 = sphi 0, %s178
    %s193 = sphi 0, %s179
    %s197 = sphi 0, %s197
    %s199 = sphi 0, %s197
    %s200 = sphi 0, %s199
    %s214 = sphi 0, %s200
    %s222 = sphi 0, %s224
    %s225 = sphi 0, %s222
    %s226 = sphi 0, %s225
    %s242 = sphi 0, %s226
    %s248 = sphi 0, %s250
    %s251 = sphi 0, %s248
    %s252 = sphi 0, %s251
    %s268 = sphi 0, %s252
  $region4: #{a_call__.3} parent=0 // loop_header_branch
    %23 = sbr.rel (%p21) target = $region8
  $region5: #{a_call__.3} parent=0 // loop_body
    %s25 = ssub.s32 %s20, 1
    %s26 = ssub.s32 %s20, 2
    %s33 = sadd.s32 1, %s28
    %p34 = scmp.ge.s32.totalorder %s33, 1
    %s35 = scalar_select %p34, 0, %s33
    %s36 = sadd.s32 1, %s27
    %s37 = scalar_select %p34, %s36, %s27
    %p38 = scmp.ge.s32.totalorder %s37, 2
    %s39 = scalar_select %p38, 0, %s37
    %s40 = ssub.s32 %s27, %s39
    %p41 = scmp.eq.s32.totalorder %s40, 0
    %s43 = sadd.s32 %s42, 1
    %s44 = scalar_select %p41, %s42, %s43
    %p47 = pneg %p41
    %p48 = scmp.eq.s32.totalorder %s20, 1
    %p49 = por %p47, %p48
    %p50 = scmp.ne.s32.totalorder %s42, %s45
    %p51 = scmp.eq.s32.totalorder %s20, 0
    %p52 = por %p50, %p51
    %p53 = scmp.ne.s32.totalorder %s42, %s45
    %p54 = scmp.eq.s32.totalorder %s25, 1
    %p55 = por %p53, %p54
    %p56 = scmp.ne.s32.totalorder %s45, %s46
    %p57 = scmp.eq.s32.totalorder %s25, 0
    %p58 = por %p56, %p57
    %p59 = scmp.ne.s32.totalorder %s45, %s46
    %p60 = scmp.eq.s32.totalorder %s26, 1
    %p61 = por %p59, %p60
    %p63 = scmp.ne.s32.totalorder %s46, %s62
    %p64 = scmp.eq.s32.totalorder %s26, 0
    %p65 = por %p63, %p64
    %s67 = sadd.s32 %s66, 1
    %p70 = scmp.eq.s32.totalorder %s20, 1
    %p71 = scmp.ne.s32.totalorder %s66, %s68
    %p72 = scmp.eq.s32.totalorder %s20, 0
    %p73 = por %p71, %p72
    %p74 = scmp.ne.s32.totalorder %s66, %s68
    %p75 = scmp.eq.s32.totalorder %s25, 1
    %p76 = por %p74, %p75
    %p77 = scmp.ne.s32.totalorder %s68, %s69
    %p78 = scmp.eq.s32.totalorder %s25, 0
    %p79 = por %p77, %p78
    %p80 = scmp.ne.s32.totalorder %s68, %s69
    %p81 = scmp.eq.s32.totalorder %s26, 1
    %p82 = por %p80, %p81
    %p84 = scmp.ne.s32.totalorder %s69, %s83
    %p85 = scmp.eq.s32.totalorder %s26, 0
    %p86 = por %p84, %p85
    %s88 = sadd.s32 %s87, 1
    %p91 = scmp.eq.s32.totalorder %s20, 1
    %p92 = scmp.ne.s32.totalorder %s87, %s89
    %p93 = scmp.eq.s32.totalorder %s20, 0
    %p94 = por %p92, %p93
    %p95 = scmp.ne.s32.totalorder %s87, %s89
    %p96 = scmp.eq.s32.totalorder %s25, 1
    %p97 = por %p95, %p96
    %p98 = scmp.ne.s32.totalorder %s89, %s90
    %p99 = scmp.eq.s32.totalorder %s25, 0
    %p100 = por %p98, %p99
    %p101 = scmp.ne.s32.totalorder %s89, %s90
    %p102 = scmp.eq.s32.totalorder %s26, 1
    %p103 = por %p101, %p102
    %p105 = scmp.ne.s32.totalorder %s90, %s104
    %p106 = scmp.eq.s32.totalorder %s26, 0
    %p107 = por %p105, %p106
    %s109 = sadd.s32 %s108, 1
    %p112 = scmp.eq.s32.totalorder %s20, 1
    %p113 = scmp.ne.s32.totalorder %s108, %s110
    %p114 = scmp.eq.s32.totalorder %s20, 0
    %p115 = por %p113, %p114
    %p116 = scmp.ne.s32.totalorder %s108, %s110
    %p117 = scmp.eq.s32.totalorder %s25, 1
    %p118 = por %p116, %p117
    %p119 = scmp.ne.s32.totalorder %s110, %s111
    %p120 = scmp.eq.s32.totalorder %s25, 0
    %p121 = por %p119, %p120
    %p122 = scmp.ne.s32.totalorder %s110, %s111
    %p123 = scmp.eq.s32.totalorder %s26, 1
    %p124 = por %p122, %p123
    %p126 = scmp.ne.s32.totalorder %s111, %s125
    %p127 = scmp.eq.s32.totalorder %s26, 0
    %p128 = por %p126, %p127
    %s129 = ssub.s32 %s27, %s39
    %p130 = scmp.eq.s32.totalorder %s129, 0
    %s132 = sadd.s32 %s131, 1
    %s133 = scalar_select %p130, %s131, %s132
    %p136 = pneg %p130
    %p137 = scmp.eq.s32.totalorder %s20, 1
    %p138 = por %p136, %p137
    %p139 = scmp.ne.s32.totalorder %s131, %s134
    %p140 = scmp.eq.s32.totalorder %s20, 0
    %p141 = por %p139, %p140
    %p142 = scmp.ne.s32.totalorder %s131, %s134
    %p143 = scmp.eq.s32.totalorder %s25, 1
    %p144 = por %p142, %p143
    %p145 = scmp.ne.s32.totalorder %s134, %s135
    %p146 = scmp.eq.s32.totalorder %s25, 0
    %p147 = por %p145, %p146
    %p148 = scmp.ne.s32.totalorder %s134, %s135
    %p149 = scmp.eq.s32.totalorder %s26, 1
    %p150 = por %p148, %p149
    %p152 = scmp.ne.s32.totalorder %s135, %s151
    %p153 = scmp.eq.s32.totalorder %s26, 0
    %p154 = por %p152, %p153
    %s156 = sadd.s32 %s155, 1
    %p159 = scmp.eq.s32.totalorder %s20, 1
    %p160 = scmp.ne.s32.totalorder %s155, %s157
    %p161 = scmp.eq.s32.totalorder %s20, 0
    %p162 = por %p160, %p161
    %p163 = scmp.ne.s32.totalorder %s155, %s157
    %p164 = scmp.eq.s32.totalorder %s25, 1
    %p165 = por %p163, %p164
    %p166 = scmp.ne.s32.totalorder %s157, %s158
    %p167 = scmp.eq.s32.totalorder %s25, 0
    %p168 = por %p166, %p167
    %p169 = scmp.ne.s32.totalorder %s157, %s158
    %p170 = scmp.eq.s32.totalorder %s26, 1
    %p171 = por %p169, %p170
    %p173 = scmp.ne.s32.totalorder %s158, %s172
    %p174 = scmp.eq.s32.totalorder %s26, 0
    %p175 = por %p173, %p174
    %s177 = sadd.s32 %s176, 1
    %p180 = scmp.eq.s32.totalorder %s20, 1
    %p181 = scmp.ne.s32.totalorder %s176, %s178
    %p182 = scmp.eq.s32.totalorder %s20, 0
    %p183 = por %p181, %p182
    %p184 = scmp.ne.s32.totalorder %s176, %s178
    %p185 = scmp.eq.s32.totalorder %s25, 1
    %p186 = por %p184, %p185
    %p187 = scmp.ne.s32.totalorder %s178, %s179
    %p188 = scmp.eq.s32.totalorder %s25, 0
    %p189 = por %p187, %p188
    %p190 = scmp.ne.s32.totalorder %s178, %s179
    %p191 = scmp.eq.s32.totalorder %s26, 1
    %p192 = por %p190, %p191
    %p194 = scmp.ne.s32.totalorder %s179, %s193
    %p195 = scmp.eq.s32.totalorder %s26, 0
    %p196 = por %p194, %p195
    %s198 = sadd.s32 %s197, 1
    %p201 = scmp.eq.s32.totalorder %s20, 1
    %p202 = scmp.ne.s32.totalorder %s197, %s199
    %p203 = scmp.eq.s32.totalorder %s20, 0
    %p204 = por %p202, %p203
    %p205 = scmp.ne.s32.totalorder %s197, %s199
    %p206 = scmp.eq.s32.totalorder %s25, 1
    %p207 = por %p205, %p206
    %p208 = scmp.ne.s32.totalorder %s199, %s200
    %p209 = scmp.eq.s32.totalorder %s25, 0
    %p210 = por %p208, %p209
    %p211 = scmp.ne.s32.totalorder %s199, %s200
    %p212 = scmp.eq.s32.totalorder %s26, 1
    %p213 = por %p211, %p212
    %p215 = scmp.ne.s32.totalorder %s200, %s214
    %p216 = scmp.eq.s32.totalorder %s26, 0
    %p217 = por %p215, %p216
    %s218 = ssub.s32 %s27, %s39
    %s219 = ssub.s32 %s28, %s35
    %s220 = sor.u32 %s218, %s219
    %p221 = scmp.eq.s32.totalorder %s220, 0
    %s223 = sadd.s32 %s222, 1
    %s224 = scalar_select %p221, %s222, %s223
    %p227 = pneg %p221
    %p228 = scmp.eq.s32.totalorder %s20, 1
    %p229 = por %p227, %p228
    %p230 = scmp.ne.s32.totalorder %s222, %s225
    %p231 = scmp.eq.s32.totalorder %s20, 0
    %p232 = por %p230, %p231
    %p233 = scmp.ne.s32.totalorder %s222, %s225
    %p234 = scmp.eq.s32.totalorder %s25, 1
    %p235 = por %p233, %p234
    %p236 = scmp.ne.s32.totalorder %s225, %s226
    %p237 = scmp.eq.s32.totalorder %s25, 0
    %p238 = por %p236, %p237
    %p239 = scmp.ne.s32.totalorder %s225, %s226
    %p240 = scmp.eq.s32.totalorder %s26, 1
    %p241 = por %p239, %p240
    %p243 = scmp.ne.s32.totalorder %s226, %s242
    %p244 = scmp.eq.s32.totalorder %s26, 0
    %p245 = por %p243, %p244
    %s246 = ssub.s32 %s27, %s39
    %p247 = scmp.eq.s32.totalorder %s246, 0
    %s249 = sadd.s32 %s248, 1
    %s250 = scalar_select %p247, %s248, %s249
    %p253 = pneg %p247
    %p254 = scmp.eq.s32.totalorder %s20, 1
    %p255 = por %p253, %p254
    %p256 = scmp.ne.s32.totalorder %s248, %s251
    %p257 = scmp.eq.s32.totalorder %s20, 0
    %p258 = por %p256, %p257
    %p259 = scmp.ne.s32.totalorder %s248, %s251
    %p260 = scmp.eq.s32.totalorder %s25, 1
    %p261 = por %p259, %p260
    %p262 = scmp.ne.s32.totalorder %s251, %s252
    %p263 = scmp.eq.s32.totalorder %s25, 0
    %p264 = por %p262, %p263
    %p265 = scmp.ne.s32.totalorder %s251, %s252
    %p266 = scmp.eq.s32.totalorder %s26, 1
    %p267 = por %p265, %p266
    %p269 = scmp.ne.s32.totalorder %s252, %s268
    %p270 = scmp.eq.s32.totalorder %s26, 0
    %p271 = por %p269, %p270
    %p272 = scmp.le.s32.totalorder 1, %s20
    %p273 = scmp.lt.s32.totalorder %s20, 3
    %p274 = pnand %p272, %p273
    %p275 = pneg %p274
    // Predicated region
    $region9: #{a_call__.3} parent=5 // pred_check
      _
    $region10: #{a_call__.3} parent=5 // pred_check_branch
      %277 = sbr.rel (%p274) target = $region12
    $region11: #{a_call__.3} parent=5 // pred_region
      %s278 = ssub.s32 %s20, 1
      // Predicated region
      $region13: #{a_call__.3} parent=11 // pred_check
        %p279 = pneg %p79
      $region14: #{a_call__.3} parent=11 // pred_check_branch
        %281 = sbr.rel (%p279) target = $region16
      $region15: #{a_call__.3} parent=11 // pred_region
        _
      $region16: #{a_call__.3} parent=11 // pred_fallthru
        _
      // Predicated region
      $region17: #{a_call__.3} parent=11 // pred_check
        %p282 = pneg %p100
      $region18: #{a_call__.3} parent=11 // pred_check_branch
        %284 = sbr.rel (%p282) target = $region20
      $region19: #{a_call__.3} parent=11 // pred_region
        _
      $region20: #{a_call__.3} parent=11 // pred_fallthru
        _
      // Predicated region
      $region21: #{a_call__.3} parent=11 // pred_check
        %p285 = pneg %p121
      $region22: #{a_call__.3} parent=11 // pred_check_branch
        %287 = sbr.rel (%p285) target = $region24
      $region23: #{a_call__.3} parent=11 // pred_region
        _
      $region24: #{a_call__.3} parent=11 // pred_fallthru
        _
      // Predicated region
      $region25: #{a_call__.3} parent=11 // pred_check
        %p288 = pneg %p168
      $region26: #{a_call__.3} parent=11 // pred_check_branch
        %290 = sbr.rel (%p288) target = $region28
      $region27: #{a_call__.3} parent=11 // pred_region
        _
      $region28: #{a_call__.3} parent=11 // pred_fallthru
        _
      // Predicated region
      $region29: #{a_call__.3} parent=11 // pred_check
        %p291 = pneg %p189
      $region30: #{a_call__.3} parent=11 // pred_check_branch
        %293 = sbr.rel (%p291) target = $region32
      $region31: #{a_call__.3} parent=11 // pred_region
        _
      $region32: #{a_call__.3} parent=11 // pred_fallthru
        _
      // Predicated region
      $region33: #{a_call__.3} parent=11 // pred_check
        %p294 = pneg %p210
      $region34: #{a_call__.3} parent=11 // pred_check_branch
        %296 = sbr.rel (%p294) target = $region36
      $region35: #{a_call__.3} parent=11 // pred_region
        _
      $region36: #{a_call__.3} parent=11 // pred_fallthru
        _
    $region12: #{a_call__.3} parent=5 // pred_fallthru
      _
    %p297 = scmp.lt.s32.totalorder %s20, 2
    // Predicated region
    $region37: #{a_call__.3} parent=5 // pred_check
      %p298 = pneg %p297
    $region38: #{a_call__.3} parent=5 // pred_check_branch
      %300 = sbr.rel (%p298) target = $region40
    $region39: #{a_call__.3} parent=5 // pred_region
      // Predicated region
      $region41: #{a_call__.3} parent=39 // pred_check
        %p301 = pneg %p52
      $region42: #{a_call__.3} parent=39 // pred_check_branch
        %303 = sbr.rel (%p301) target = $region44
      $region43: #{a_call__.3} parent=39 // pred_region
        %p304 = scmp.lt.s32.totalorder %s27, 1
        %s305 = scalar_select %p304, %s27, 1
        %s306 = smul.addr %s305, 8
        %s307 = scalar_lea.vmem %s0, %s306
      $region44: #{a_call__.3} parent=39 // pred_fallthru
        _
      // Predicated region
      $region45: #{a_call__.3} parent=39 // pred_check
        %p308 = pneg %p141
      $region46: #{a_call__.3} parent=39 // pred_check_branch
        %310 = sbr.rel (%p308) target = $region48
      $region47: #{a_call__.3} parent=39 // pred_region
        %p311 = scmp.lt.s32.totalorder %s27, 1
        %s312 = scalar_select %p311, %s27, 1
        %s313 = smul.addr %s312, 8
        %s314 = scalar_lea.vmem %s4, %s313
      $region48: #{a_call__.3} parent=39 // pred_fallthru
        _
    $region40: #{a_call__.3} parent=5 // pred_fallthru
      _
    %p315 = scmp.le.s32.totalorder 1, %s20
    %p316 = scmp.lt.s32.totalorder %s20, 3
    %p317 = pnand %p315, %p316
    %p318 = pneg %p317
    // Predicated region
    $region49: #{a_call__.3} parent=5 // pred_check
      _
    $region50: #{a_call__.3} parent=5 // pred_check_branch
      %320 = sbr.rel (%p317) target = $region52
    $region51: #{a_call__.3} parent=5 // pred_region
      %s321 = ssub.s32 %s20, 1
      %p322 = scmp.lt.s32.totalorder %s29, 1
      %s323 = scalar_select %p322, %s29, 1
      %s324 = smul.addr %s323, 8
      %s325 = scalar_lea.vmem %s0, %s324
      %p326 = pneg %p58
      %p327 = pneg %p55
      %p328 = pneg %p79
      %p329 = pneg %p76
      %p330 = pneg %p100
      %p331 = pneg %p97
      %p332 = pneg %p121
      %p333 = pneg %p118
      %p334 = scmp.lt.s32.totalorder %s29, 1
      %s335 = scalar_select %p334, %s29, 1
      %s336 = smul.addr %s335, 8
      %s337 = scalar_lea.vmem %s4, %s336
      %p338 = pneg %p147
      %p339 = pneg %p144
      %p340 = pneg %p168
      %p341 = pneg %p165
      %p342 = pneg %p189
      %p343 = pneg %p186
      %p344 = pneg %p210
      %p345 = pneg %p207
      %p346 = pneg %p238
      %p347 = pneg %p235
      %p348 = scmp.lt.s32.totalorder %s29, 1
      %s349 = scalar_select %p348, %s29, 1
      %p350 = scmp.lt.s32.totalorder %s30, 0
      %s351 = scalar_select %p350, %s30, 0
      %s352 = sadd.s32 %s351, %s349
      %s353 = smul.addr %s352, 8
      %s354 = scalar_lea.vmem %s8, %s353
      %p355 = pneg %p264
      %p356 = pneg %p261
      %p357 = scmp.lt.s32.totalorder %s29, 1
      %s358 = scalar_select %p357, %s29, 1
      %s359 = scalar_lea.vmem %s9, %s358
      %p360 = scmp.lt.s32.totalorder %s29, 1
      %s361 = scalar_select %p360, %s29, 1
      %s362 = smul.addr %s361, 8
      %s363 = scalar_lea.vmem %s0, %s362
      %p364 = scmp.lt.s32.totalorder %s29, 1
      %s365 = scalar_select %p364, %s29, 1
      %s366 = smul.addr %s365, 8
      %s367 = scalar_lea.vmem %s4, %s366
      %p368 = scmp.lt.s32.totalorder %s29, 1
      %s369 = scalar_select %p368, %s29, 1
      %p370 = scmp.lt.s32.totalorder %s30, 0
      %s371 = scalar_select %p370, %s30, 0
      %s372 = sadd.s32 %s371, %s369
      %s373 = smul.addr %s372, 8
      %s374 = scalar_lea.vmem %s8, %s373
      %p375 = scmp.lt.s32.totalorder %s29, 1
      %s376 = scalar_select %p375, %s29, 1
      %s377 = scalar_lea.vmem %s9, %s376
      %s378 = smul.u32 %s30, 8
      %p379 = scmp.eq.s32.totalorder %s30, 0
      // Predicated region
      $region53: #{a_call__.3} parent=51 // pred_check
        %p380 = pneg %p379
      $region54: #{a_call__.3} parent=51 // pred_check_branch
        %382 = sbr.rel (%p380) target = $region56
      $region55: #{a_call__.3} parent=51 // pred_region
        %383 = vst [vmem:[#allocation2] sm:$0xff] 0.0
        %384 = vst [vmem:[#allocation2 + $0x10] sm:$0xff] 0.0
        %v385 = vld [vmem:[%s363] sm:$0xff]
        %386 = vst [vmem:[#allocation2 + $0x8] sm:$0xff] %v385
        %387 = vst [vmem:[#allocation3] sm:$0xff] 0.0
        %388 = vst [vmem:[#allocation3 + $0x10] sm:$0xff] 0.0
        %v389 = vld [vmem:[%s367] sm:$0xff]
        %390 = vst [vmem:[#allocation3 + $0x8] sm:$0xff] %v389
      $region56: #{a_call__.3} parent=51 // pred_fallthru
        _
      %s391 = scalar_lea.vmem [#allocation2], %s378
      %v392 = vld [vmem:[%s391] sm:$0xff]
      %v393 = vld [vmem:[%s391 + $0x8] sm:$0xff]
      %v394 = vld [vmem:[%s391 + $0x10] sm:$0xff]
      %v395 = vld [vmem:[%s1] sm:$0xff]
      %v396 = vld [vmem:[%s1 + $0x8] sm:$0xff]
      %v397 = vld [vmem:[%s1 + $0x10] sm:$0xff]
      %v398 = vld [vmem:[%s1 + $0x18] sm:$0xff]
      %v399 = vld [vmem:[%s1 + $0x20] sm:$0xff]
      %v400 = vld [vmem:[%s1 + $0x28] sm:$0xff]
      %v401 = vld [vmem:[%s1 + $0x30] sm:$0xff]
      %v402 = vld [vmem:[%s1 + $0x38] sm:$0xff]
      %v403 = vld [vmem:[%s1 + $0x40] sm:$0xff]
      %v404 = vld [vmem:[%s1 + $0x48] sm:$0xff]
      %v405 = vld [vmem:[%s1 + $0x50] sm:$0xff]
      %v406 = vld [vmem:[%s1 + $0x58] sm:$0xff]
      %v407 = vld [vmem:[%s1 + $0x60] sm:$0xff]
      %v408 = vld [vmem:[%s1 + $0x68] sm:$0xff]
      %v409 = vld [vmem:[%s1 + $0x70] sm:$0xff]
      %v410 = vld [vmem:[%s1 + $0x78] sm:$0xff]
      %s411 = scalar_lea.vmem %s1, 128
      %v412 = vld [vmem:[%s411] sm:$0xff]
      %v413 = vld [vmem:[%s411 + $0x8] sm:$0xff]
      %v414 = vld [vmem:[%s411 + $0x10] sm:$0xff]
      %v415 = vld [vmem:[%s411 + $0x18] sm:$0xff]
      %v416 = vld [vmem:[%s411 + $0x20] sm:$0xff]
      %v417 = vld [vmem:[%s411 + $0x28] sm:$0xff]
      %v418 = vld [vmem:[%s411 + $0x30] sm:$0xff]
      %v419 = vld [vmem:[%s411 + $0x38] sm:$0xff]
      %v420 = vld [vmem:[%s411 + $0x40] sm:$0xff]
      %v421 = vld [vmem:[%s411 + $0x48] sm:$0xff]
      %v422 = vld [vmem:[%s411 + $0x50] sm:$0xff]
      %v423 = vld [vmem:[%s411 + $0x58] sm:$0xff]
      %v424 = vld [vmem:[%s411 + $0x60] sm:$0xff]
      %v425 = vld [vmem:[%s411 + $0x68] sm:$0xff]
      %v426 = vld [vmem:[%s411 + $0x70] sm:$0xff]
      %v427 = vld [vmem:[%s411 + $0x78] sm:$0xff]
      %428 = vmatprep.subr.mxu0 0.0
      %429 = vmatpush1.msra.mxu0 %v427
      %430 = vmatprep.subr.mxu0 0.0
      %431 = vmatpush1.msra.mxu0 %v426
      %432 = vmatprep.subr.mxu0 0.0
      %433 = vmatpush1.msra.mxu0 %v425
      %434 = vmatprep.subr.mxu0 0.0
      %435 = vmatpush1.msra.mxu0 %v424
      %436 = vmatprep.subr.mxu0 0.0
      %437 = vmatpush1.msra.mxu0 %v423
      %438 = vmatprep.subr.mxu0 0.0
      %439 = vmatpush1.msra.mxu0 %v422
      %440 = vmatprep.subr.mxu0 0.0
      %441 = vmatpush1.msra.mxu0 %v421
      %442 = vmatprep.subr.mxu0 0.0
      %443 = vmatpush1.msra.mxu0 %v420
      %444 = vmatprep.subr.mxu0 0.0
      %445 = vmatpush1.msra.mxu0 %v419
      %446 = vmatprep.subr.mxu0 0.0
      %447 = vmatpush1.msra.mxu0 %v418
      %448 = vmatprep.subr.mxu0 0.0
      %449 = vmatpush1.msra.mxu0 %v417
      %450 = vmatprep.subr.mxu0 0.0
      %451 = vmatpush1.msra.mxu0 %v416
      %452 = vmatprep.subr.mxu0 0.0
      %453 = vmatpush1.msra.mxu0 %v415
      %454 = vmatprep.subr.mxu0 0.0
      %455 = vmatpush1.msra.mxu0 %v414
      %456 = vmatprep.subr.mxu0 0.0
      %457 = vmatpush1.msra.mxu0 %v413
      %458 = vmatprep.subr.mxu0 0.0
      %459 = vmatpush1.msra.mxu0 %v412
      %460 = vmatprep.subr.mxu0 0.0
      %461 = vmatpush2.msra.mxu0 0.0
      %462 = vmatprep.subr.mxu0 0.0
      %463 = vmatpush2.msra.mxu0 0.0
      %464 = vmatprep.subr.mxu0 0.0
      %465 = vmatpush2.msra.mxu0 0.0
      %466 = vmatprep.subr.mxu0 0.0
      %467 = vmatpush2.msra.mxu0 0.0
      %468 = vmatprep.subr.mxu0 0.0
      %469 = vmatpush2.msra.mxu0 0.0
      %470 = vmatprep.subr.mxu0 0.0
      %471 = vmatpush2.msra.mxu0 0.0
      %472 = vmatprep.subr.mxu0 0.0
      %473 = vmatpush2.msra.mxu0 0.0
      %474 = vmatprep.subr.mxu0 0.0
      %475 = vmatpush2.msra.mxu0 0.0
      %476 = vmatprep.subr.mxu0 0.0
      %477 = vmatpush2.msra.mxu0 0.0
      %478 = vmatprep.subr.mxu0 0.0
      %479 = vmatpush2.msra.mxu0 0.0
      %480 = vmatprep.subr.mxu0 0.0
      %481 = vmatpush2.msra.mxu0 0.0
      %482 = vmatprep.subr.mxu0 0.0
      %483 = vmatpush2.msra.mxu0 0.0
      %484 = vmatprep.subr.mxu0 0.0
      %485 = vmatpush2.msra.mxu0 0.0
      %486 = vmatprep.subr.mxu0 0.0
      %487 = vmatpush2.msra.mxu0 0.0
      %488 = vmatprep.subr.mxu0 0.0
      %489 = vmatpush2.msra.mxu0 0.0
      %490 = vmatprep.subr.mxu0 0.0
      %491 = vmatpush2.msra.mxu0 0.0
      %492 = vmatprep.mubr.f32.mxu0 0.0
      %493 = vmatmul.mubr.f32.gmra.mxu0 %v393
      %v494 = vpop.f32.mrf.mxu0
      %v495 = vadd.f32 0.0, %v494
      %v496 = vpop.f32.mrf.mxu0
      %497 = vdwg.mxu0
      %vm500 = vcmask 1040384
      %v501 = vrot.slane %v392, 7
      %v502 = vrot.slane %v393, 7
      %v503 = vsel %vm500, %v501, %v502
      %505 = vmatprep.subr.mxu0 0.0
      %506 = vmatpush1.msra.mxu0 %v410
      %507 = vmatprep.subr.mxu0 0.0
      %508 = vmatpush1.msra.mxu0 %v409
      %509 = vmatprep.subr.mxu0 0.0
      %510 = vmatpush1.msra.mxu0 %v408
      %511 = vmatprep.subr.mxu0 0.0
      %512 = vmatpush1.msra.mxu0 %v407
      %513 = vmatprep.subr.mxu0 0.0
      %514 = vmatpush1.msra.mxu0 %v406
      %515 = vmatprep.subr.mxu0 0.0
      %516 = vmatpush1.msra.mxu0 %v405
      %517 = vmatprep.subr.mxu0 0.0
      %518 = vmatpush1.msra.mxu0 %v404
      %519 = vmatprep.subr.mxu0 0.0
      %520 = vmatpush1.msra.mxu0 %v403
      %521 = vmatprep.subr.mxu0 0.0
      %522 = vmatpush1.msra.mxu0 %v402
      %523 = vmatprep.subr.mxu0 0.0
      %524 = vmatpush1.msra.mxu0 %v401
      %525 = vmatprep.subr.mxu0 0.0
      %526 = vmatpush1.msra.mxu0 %v400
      %527 = vmatprep.subr.mxu0 0.0
      %528 = vmatpush1.msra.mxu0 %v399
      %529 = vmatprep.subr.mxu0 0.0
      %530 = vmatpush1.msra.mxu0 %v398
      %531 = vmatprep.subr.mxu0 0.0
      %532 = vmatpush1.msra.mxu0 %v397
      %533 = vmatprep.subr.mxu0 0.0
      %534 = vmatpush1.msra.mxu0 %v396
      %535 = vmatprep.subr.mxu0 0.0
      %536 = vmatpush1.msra.mxu0 %v395
      %537 = vmatprep.subr.mxu0 0.0
      %538 = vmatpush2.msra.mxu0 0.0
      %539 = vmatprep.subr.mxu0 0.0
      %540 = vmatpush2.msra.mxu0 0.0
      %541 = vmatprep.subr.mxu0 0.0
      %542 = vmatpush2.msra.mxu0 0.0
      %543 = vmatprep.subr.mxu0 0.0
      %544 = vmatpush2.msra.mxu0 0.0
      %545 = vmatprep.subr.mxu0 0.0
      %546 = vmatpush2.msra.mxu0 0.0
      %547 = vmatprep.subr.mxu0 0.0
      %548 = vmatpush2.msra.mxu0 0.0
      %549 = vmatprep.subr.mxu0 0.0
      %550 = vmatpush2.msra.mxu0 0.0
      %551 = vmatprep.subr.mxu0 0.0
      %552 = vmatpush2.msra.mxu0 0.0
      %553 = vmatprep.subr.mxu0 0.0
      %554 = vmatpush2.msra.mxu0 0.0
      %555 = vmatprep.subr.mxu0 0.0
      %556 = vmatpush2.msra.mxu0 0.0
      %557 = vmatprep.subr.mxu0 0.0
      %558 = vmatpush2.msra.mxu0 0.0
      %559 = vmatprep.subr.mxu0 0.0
      %560 = vmatpush2.msra.mxu0 0.0
      %561 = vmatprep.subr.mxu0 0.0
      %562 = vmatpush2.msra.mxu0 0.0
      %563 = vmatprep.subr.mxu0 0.0
      %564 = vmatpush2.msra.mxu0 0.0
      %565 = vmatprep.subr.mxu0 0.0
      %566 = vmatpush2.msra.mxu0 0.0
      %567 = vmatprep.subr.mxu0 0.0
      %568 = vmatpush2.msra.mxu0 0.0
      %569 = vmatprep.mubr.f32.mxu0 0.0
      %570 = vmatmul.mubr.f32.gmra.mxu0 %v503
      %v571 = vpop.f32.mrf.mxu0
      %v572 = vadd.f32 %v495, %v571
      %v573 = vpop.f32.mrf.mxu0
      %574 = vdwg.mxu0
      %s575 = scalar_lea.vmem %s1, 256
      %v576 = vld [vmem:[%s575] sm:$0xff]
      %v577 = vld [vmem:[%s575 + $0x8] sm:$0xff]
      %v578 = vld [vmem:[%s575 + $0x10] sm:$0xff]
      %v579 = vld [vmem:[%s575 + $0x18] sm:$0xff]
      %v580 = vld [vmem:[%s575 + $0x20] sm:$0xff]
      %v581 = vld [vmem:[%s575 + $0x28] sm:$0xff]
      %v582 = vld [vmem:[%s575 + $0x30] sm:$0xff]
      %v583 = vld [vmem:[%s575 + $0x38] sm:$0xff]
      %v584 = vld [vmem:[%s575 + $0x40] sm:$0xff]
      %v585 = vld [vmem:[%s575 + $0x48] sm:$0xff]
      %v586 = vld [vmem:[%s575 + $0x50] sm:$0xff]
      %v587 = vld [vmem:[%s575 + $0x58] sm:$0xff]
      %v588 = vld [vmem:[%s575 + $0x60] sm:$0xff]
      %v589 = vld [vmem:[%s575 + $0x68] sm:$0xff]
      %v590 = vld [vmem:[%s575 + $0x70] sm:$0xff]
      %v591 = vld [vmem:[%s575 + $0x78] sm:$0xff]
      %vm593 = vcmask 1046528
      %v594 = vrot.slane %v393, 1
      %v595 = vrot.slane %v394, 1
      %v596 = vsel %vm593, %v594, %v595
      %598 = vmatprep.subr.mxu0 0.0
      %599 = vmatpush1.msra.mxu0 %v591
      %600 = vmatprep.subr.mxu0 0.0
      %601 = vmatpush1.msra.mxu0 %v590
      %602 = vmatprep.subr.mxu0 0.0
      %603 = vmatpush1.msra.mxu0 %v589
      %604 = vmatprep.subr.mxu0 0.0
      %605 = vmatpush1.msra.mxu0 %v588
      %606 = vmatprep.subr.mxu0 0.0
      %607 = vmatpush1.msra.mxu0 %v587
      %608 = vmatprep.subr.mxu0 0.0
      %609 = vmatpush1.msra.mxu0 %v586
      %610 = vmatprep.subr.mxu0 0.0
      %611 = vmatpush1.msra.mxu0 %v585
      %612 = vmatprep.subr.mxu0 0.0
      %613 = vmatpush1.msra.mxu0 %v584
      %614 = vmatprep.subr.mxu0 0.0
      %615 = vmatpush1.msra.mxu0 %v583
      %616 = vmatprep.subr.mxu0 0.0
      %617 = vmatpush1.msra.mxu0 %v582
      %618 = vmatprep.subr.mxu0 0.0
      %619 = vmatpush1.msra.mxu0 %v581
      %620 = vmatprep.subr.mxu0 0.0
      %621 = vmatpush1.msra.mxu0 %v580
      %622 = vmatprep.subr.mxu0 0.0
      %623 = vmatpush1.msra.mxu0 %v579
      %624 = vmatprep.subr.mxu0 0.0
      %625 = vmatpush1.msra.mxu0 %v578
      %626 = vmatprep.subr.mxu0 0.0
      %627 = vmatpush1.msra.mxu0 %v577
      %628 = vmatprep.subr.mxu0 0.0
      %629 = vmatpush1.msra.mxu0 %v576
      %630 = vmatprep.subr.mxu0 0.0
      %631 = vmatpush2.msra.mxu0 0.0
      %632 = vmatprep.subr.mxu0 0.0
      %633 = vmatpush2.msra.mxu0 0.0
      %634 = vmatprep.subr.mxu0 0.0
      %635 = vmatpush2.msra.mxu0 0.0
      %636 = vmatprep.subr.mxu0 0.0
      %637 = vmatpush2.msra.mxu0 0.0
      %638 = vmatprep.subr.mxu0 0.0
      %639 = vmatpush2.msra.mxu0 0.0
      %640 = vmatprep.subr.mxu0 0.0
      %641 = vmatpush2.msra.mxu0 0.0
      %642 = vmatprep.subr.mxu0 0.0
      %643 = vmatpush2.msra.mxu0 0.0
      %644 = vmatprep.subr.mxu0 0.0
      %645 = vmatpush2.msra.mxu0 0.0
      %646 = vmatprep.subr.mxu0 0.0
      %647 = vmatpush2.msra.mxu0 0.0
      %648 = vmatprep.subr.mxu0 0.0
      %649 = vmatpush2.msra.mxu0 0.0
      %650 = vmatprep.subr.mxu0 0.0
      %651 = vmatpush2.msra.mxu0 0.0
      %652 = vmatprep.subr.mxu0 0.0
      %653 = vmatpush2.msra.mxu0 0.0
      %654 = vmatprep.subr.mxu0 0.0
      %655 = vmatpush2.msra.mxu0 0.0
      %656 = vmatprep.subr.mxu0 0.0
      %657 = vmatpush2.msra.mxu0 0.0
      %658 = vmatprep.subr.mxu0 0.0
      %659 = vmatpush2.msra.mxu0 0.0
      %660 = vmatprep.subr.mxu0 0.0
      %661 = vmatpush2.msra.mxu0 0.0
      %662 = vmatprep.mubr.f32.mxu0 0.0
      %663 = vmatmul.mubr.f32.gmra.mxu0 %v596
      %v664 = vpop.f32.mrf.mxu0
      %v665 = vadd.f32 0.0, %v664
      %v666 = vpop.f32.mrf.mxu0
      %667 = vdwg.mxu0
      %v668 = vadd.f32 %v572, %v665
      %v669 = vld [vmem:[#allocation4] sm:$0x1]
      %v671 = vlaneseq
      %v672 = vshrl.u32 %v671, 7
      %v673 = vsub.s32 0, %v672
      %v674 = vrot.slane %v669, %v673
      %675 = vset.pattern.permute.xlu0 0
      %676 = vperm.xlu0 %675, %v674
      %v677 = vpop.permute.xlu0 %676
      %v679 = vmul.f32 %v668, %v677
      %v680 = vld [vmem:[%s2] sm:$0x1]
      %v682 = vlaneseq
      %v683 = vshrl.u32 %v682, 7
      %v684 = vsub.s32 0, %v683
      %v685 = vrot.slane %v680, %v684
      %v687 = vadd.f32 %v679, %v685
      %v688 = vmax.f32 %v687, 0.0
      %v689 = vadd.f32 %v688, 0.0
      %s690 = scalar_lea.vmem [#allocation3], %s378
      %v691 = vld [vmem:[%s690] sm:$0xff]
      %v692 = vld [vmem:[%s690 + $0x8] sm:$0xff]
      %v693 = vld [vmem:[%s690 + $0x10] sm:$0xff]
      %v694 = vld [vmem:[%s5] sm:$0xff]
      %v695 = vld [vmem:[%s5 + $0x8] sm:$0xff]
      %v696 = vld [vmem:[%s5 + $0x10] sm:$0xff]
      %v697 = vld [vmem:[%s5 + $0x18] sm:$0xff]
      %v698 = vld [vmem:[%s5 + $0x20] sm:$0xff]
      %v699 = vld [vmem:[%s5 + $0x28] sm:$0xff]
      %v700 = vld [vmem:[%s5 + $0x30] sm:$0xff]
      %v701 = vld [vmem:[%s5 + $0x38] sm:$0xff]
      %v702 = vld [vmem:[%s5 + $0x40] sm:$0xff]
      %v703 = vld [vmem:[%s5 + $0x48] sm:$0xff]
      %v704 = vld [vmem:[%s5 + $0x50] sm:$0xff]
      %v705 = vld [vmem:[%s5 + $0x58] sm:$0xff]
      %v706 = vld [vmem:[%s5 + $0x60] sm:$0xff]
      %v707 = vld [vmem:[%s5 + $0x68] sm:$0xff]
      %v708 = vld [vmem:[%s5 + $0x70] sm:$0xff]
      %v709 = vld [vmem:[%s5 + $0x78] sm:$0xff]
      %s710 = scalar_lea.vmem %s5, 128
      %v711 = vld [vmem:[%s710] sm:$0xff]
      %v712 = vld [vmem:[%s710 + $0x8] sm:$0xff]
      %v713 = vld [vmem:[%s710 + $0x10] sm:$0xff]
      %v714 = vld [vmem:[%s710 + $0x18] sm:$0xff]
      %v715 = vld [vmem:[%s710 + $0x20] sm:$0xff]
      %v716 = vld [vmem:[%s710 + $0x28] sm:$0xff]
      %v717 = vld [vmem:[%s710 + $0x30] sm:$0xff]
      %v718 = vld [vmem:[%s710 + $0x38] sm:$0xff]
      %v719 = vld [vmem:[%s710 + $0x40] sm:$0xff]
      %v720 = vld [vmem:[%s710 + $0x48] sm:$0xff]
      %v721 = vld [vmem:[%s710 + $0x50] sm:$0xff]
      %v722 = vld [vmem:[%s710 + $0x58] sm:$0xff]
      %v723 = vld [vmem:[%s710 + $0x60] sm:$0xff]
      %v724 = vld [vmem:[%s710 + $0x68] sm:$0xff]
      %v725 = vld [vmem:[%s710 + $0x70] sm:$0xff]
      %v726 = vld [vmem:[%s710 + $0x78] sm:$0xff]
      %727 = vmatprep.subr.mxu0 0.0
      %728 = vmatpush1.msra.mxu0 %v726
      %729 = vmatprep.subr.mxu0 0.0
      %730 = vmatpush1.msra.mxu0 %v725
      %731 = vmatprep.subr.mxu0 0.0
      %732 = vmatpush1.msra.mxu0 %v724
      %733 = vmatprep.subr.mxu0 0.0
      %734 = vmatpush1.msra.mxu0 %v723
      %735 = vmatprep.subr.mxu0 0.0
      %736 = vmatpush1.msra.mxu0 %v722
      %737 = vmatprep.subr.mxu0 0.0
      %738 = vmatpush1.msra.mxu0 %v721
      %739 = vmatprep.subr.mxu0 0.0
      %740 = vmatpush1.msra.mxu0 %v720
      %741 = vmatprep.subr.mxu0 0.0
      %742 = vmatpush1.msra.mxu0 %v719
      %743 = vmatprep.subr.mxu0 0.0
      %744 = vmatpush1.msra.mxu0 %v718
      %745 = vmatprep.subr.mxu0 0.0
      %746 = vmatpush1.msra.mxu0 %v717
      %747 = vmatprep.subr.mxu0 0.0
      %748 = vmatpush1.msra.mxu0 %v716
      %749 = vmatprep.subr.mxu0 0.0
      %750 = vmatpush1.msra.mxu0 %v715
      %751 = vmatprep.subr.mxu0 0.0
      %752 = vmatpush1.msra.mxu0 %v714
      %753 = vmatprep.subr.mxu0 0.0
      %754 = vmatpush1.msra.mxu0 %v713
      %755 = vmatprep.subr.mxu0 0.0
      %756 = vmatpush1.msra.mxu0 %v712
      %757 = vmatprep.subr.mxu0 0.0
      %758 = vmatpush1.msra.mxu0 %v711
      %759 = vmatprep.subr.mxu0 0.0
      %760 = vmatpush2.msra.mxu0 0.0
      %761 = vmatprep.subr.mxu0 0.0
      %762 = vmatpush2.msra.mxu0 0.0
      %763 = vmatprep.subr.mxu0 0.0
      %764 = vmatpush2.msra.mxu0 0.0
      %765 = vmatprep.subr.mxu0 0.0
      %766 = vmatpush2.msra.mxu0 0.0
      %767 = vmatprep.subr.mxu0 0.0
      %768 = vmatpush2.msra.mxu0 0.0
      %769 = vmatprep.subr.mxu0 0.0
      %770 = vmatpush2.msra.mxu0 0.0
      %771 = vmatprep.subr.mxu0 0.0
      %772 = vmatpush2.msra.mxu0 0.0
      %773 = vmatprep.subr.mxu0 0.0
      %774 = vmatpush2.msra.mxu0 0.0
      %775 = vmatprep.subr.mxu0 0.0
      %776 = vmatpush2.msra.mxu0 0.0
      %777 = vmatprep.subr.mxu0 0.0
      %778 = vmatpush2.msra.mxu0 0.0
      %779 = vmatprep.subr.mxu0 0.0
      %780 = vmatpush2.msra.mxu0 0.0
      %781 = vmatprep.subr.mxu0 0.0
      %782 = vmatpush2.msra.mxu0 0.0
      %783 = vmatprep.subr.mxu0 0.0
      %784 = vmatpush2.msra.mxu0 0.0
      %785 = vmatprep.subr.mxu0 0.0
      %786 = vmatpush2.msra.mxu0 0.0
      %787 = vmatprep.subr.mxu0 0.0
      %788 = vmatpush2.msra.mxu0 0.0
      %789 = vmatprep.subr.mxu0 0.0
      %790 = vmatpush2.msra.mxu0 0.0
      %791 = vmatprep.mubr.f32.mxu0 0.0
      %792 = vmatmul.mubr.f32.gmra.mxu0 %v692
      %v793 = vpop.f32.mrf.mxu0
      %v794 = vadd.f32 0.0, %v793
      %v795 = vpop.f32.mrf.mxu0
      %796 = vdwg.mxu0
      %v799 = vrot.slane %v691, 7
      %v800 = vrot.slane %v692, 7
      %v801 = vsel %vm500, %v799, %v800
      %803 = vmatprep.subr.mxu0 0.0
      %804 = vmatpush1.msra.mxu0 %v709
      %805 = vmatprep.subr.mxu0 0.0
      %806 = vmatpush1.msra.mxu0 %v708
      %807 = vmatprep.subr.mxu0 0.0
      %808 = vmatpush1.msra.mxu0 %v707
      %809 = vmatprep.subr.mxu0 0.0
      %810 = vmatpush1.msra.mxu0 %v706
      %811 = vmatprep.subr.mxu0 0.0
      %812 = vmatpush1.msra.mxu0 %v705
      %813 = vmatprep.subr.mxu0 0.0
      %814 = vmatpush1.msra.mxu0 %v704
      %815 = vmatprep.subr.mxu0 0.0
      %816 = vmatpush1.msra.mxu0 %v703
      %817 = vmatprep.subr.mxu0 0.0
      %818 = vmatpush1.msra.mxu0 %v702
      %819 = vmatprep.subr.mxu0 0.0
      %820 = vmatpush1.msra.mxu0 %v701
      %821 = vmatprep.subr.mxu0 0.0
      %822 = vmatpush1.msra.mxu0 %v700
      %823 = vmatprep.subr.mxu0 0.0
      %824 = vmatpush1.msra.mxu0 %v699
      %825 = vmatprep.subr.mxu0 0.0
      %826 = vmatpush1.msra.mxu0 %v698
      %827 = vmatprep.subr.mxu0 0.0
      %828 = vmatpush1.msra.mxu0 %v697
      %829 = vmatprep.subr.mxu0 0.0
      %830 = vmatpush1.msra.mxu0 %v696
      %831 = vmatprep.subr.mxu0 0.0
      %832 = vmatpush1.msra.mxu0 %v695
      %833 = vmatprep.subr.mxu0 0.0
      %834 = vmatpush1.msra.mxu0 %v694
      %835 = vmatprep.subr.mxu0 0.0
      %836 = vmatpush2.msra.mxu0 0.0
      %837 = vmatprep.subr.mxu0 0.0
      %838 = vmatpush2.msra.mxu0 0.0
      %839 = vmatprep.subr.mxu0 0.0
      %840 = vmatpush2.msra.mxu0 0.0
      %841 = vmatprep.subr.mxu0 0.0
      %842 = vmatpush2.msra.mxu0 0.0
      %843 = vmatprep.subr.mxu0 0.0
      %844 = vmatpush2.msra.mxu0 0.0
      %845 = vmatprep.subr.mxu0 0.0
      %846 = vmatpush2.msra.mxu0 0.0
      %847 = vmatprep.subr.mxu0 0.0
      %848 = vmatpush2.msra.mxu0 0.0
      %849 = vmatprep.subr.mxu0 0.0
      %850 = vmatpush2.msra.mxu0 0.0
      %851 = vmatprep.subr.mxu0 0.0
      %852 = vmatpush2.msra.mxu0 0.0
      %853 = vmatprep.subr.mxu0 0.0
      %854 = vmatpush2.msra.mxu0 0.0
      %855 = vmatprep.subr.mxu0 0.0
      %856 = vmatpush2.msra.mxu0 0.0
      %857 = vmatprep.subr.mxu0 0.0
      %858 = vmatpush2.msra.mxu0 0.0
      %859 = vmatprep.subr.mxu0 0.0
      %860 = vmatpush2.msra.mxu0 0.0
      %861 = vmatprep.subr.mxu0 0.0
      %862 = vmatpush2.msra.mxu0 0.0
      %863 = vmatprep.subr.mxu0 0.0
      %864 = vmatpush2.msra.mxu0 0.0
      %865 = vmatprep.subr.mxu0 0.0
      %866 = vmatpush2.msra.mxu0 0.0
      %867 = vmatprep.mubr.f32.mxu0 0.0
      %868 = vmatmul.mubr.f32.gmra.mxu0 %v801
      %v869 = vpop.f32.mrf.mxu0
      %v870 = vadd.f32 %v794, %v869
      %v871 = vpop.f32.mrf.mxu0
      %872 = vdwg.mxu0
      %s873 = scalar_lea.vmem %s5, 256
      %v874 = vld [vmem:[%s873] sm:$0xff]
      %v875 = vld [vmem:[%s873 + $0x8] sm:$0xff]
      %v876 = vld [vmem:[%s873 + $0x10] sm:$0xff]
      %v877 = vld [vmem:[%s873 + $0x18] sm:$0xff]
      %v878 = vld [vmem:[%s873 + $0x20] sm:$0xff]
      %v879 = vld [vmem:[%s873 + $0x28] sm:$0xff]
      %v880 = vld [vmem:[%s873 + $0x30] sm:$0xff]
      %v881 = vld [vmem:[%s873 + $0x38] sm:$0xff]
      %v882 = vld [vmem:[%s873 + $0x40] sm:$0xff]
      %v883 = vld [vmem:[%s873 + $0x48] sm:$0xff]
      %v884 = vld [vmem:[%s873 + $0x50] sm:$0xff]
      %v885 = vld [vmem:[%s873 + $0x58] sm:$0xff]
      %v886 = vld [vmem:[%s873 + $0x60] sm:$0xff]
      %v887 = vld [vmem:[%s873 + $0x68] sm:$0xff]
      %v888 = vld [vmem:[%s873 + $0x70] sm:$0xff]
      %v889 = vld [vmem:[%s873 + $0x78] sm:$0xff]
      %v891 = vrot.slane %v692, 1
      %v892 = vrot.slane %v693, 1
      %v893 = vsel %vm593, %v891, %v892
      %895 = vmatprep.subr.mxu0 0.0
      %896 = vmatpush1.msra.mxu0 %v889
      %897 = vmatprep.subr.mxu0 0.0
      %898 = vmatpush1.msra.mxu0 %v888
      %899 = vmatprep.subr.mxu0 0.0
      %900 = vmatpush1.msra.mxu0 %v887
      %901 = vmatprep.subr.mxu0 0.0
      %902 = vmatpush1.msra.mxu0 %v886
      %903 = vmatprep.subr.mxu0 0.0
      %904 = vmatpush1.msra.mxu0 %v885
      %905 = vmatprep.subr.mxu0 0.0
      %906 = vmatpush1.msra.mxu0 %v884
      %907 = vmatprep.subr.mxu0 0.0
      %908 = vmatpush1.msra.mxu0 %v883
      %909 = vmatprep.subr.mxu0 0.0
      %910 = vmatpush1.msra.mxu0 %v882
      %911 = vmatprep.subr.mxu0 0.0
      %912 = vmatpush1.msra.mxu0 %v881
      %913 = vmatprep.subr.mxu0 0.0
      %914 = vmatpush1.msra.mxu0 %v880
      %915 = vmatprep.subr.mxu0 0.0
      %916 = vmatpush1.msra.mxu0 %v879
      %917 = vmatprep.subr.mxu0 0.0
      %918 = vmatpush1.msra.mxu0 %v878
      %919 = vmatprep.subr.mxu0 0.0
      %920 = vmatpush1.msra.mxu0 %v877
      %921 = vmatprep.subr.mxu0 0.0
      %922 = vmatpush1.msra.mxu0 %v876
      %923 = vmatprep.subr.mxu0 0.0
      %924 = vmatpush1.msra.mxu0 %v875
      %925 = vmatprep.subr.mxu0 0.0
      %926 = vmatpush1.msra.mxu0 %v874
      %927 = vmatprep.subr.mxu0 0.0
      %928 = vmatpush2.msra.mxu0 0.0
      %929 = vmatprep.subr.mxu0 0.0
      %930 = vmatpush2.msra.mxu0 0.0
      %931 = vmatprep.subr.mxu0 0.0
      %932 = vmatpush2.msra.mxu0 0.0
      %933 = vmatprep.subr.mxu0 0.0
      %934 = vmatpush2.msra.mxu0 0.0
      %935 = vmatprep.subr.mxu0 0.0
      %936 = vmatpush2.msra.mxu0 0.0
      %937 = vmatprep.subr.mxu0 0.0
      %938 = vmatpush2.msra.mxu0 0.0
      %939 = vmatprep.subr.mxu0 0.0
      %940 = vmatpush2.msra.mxu0 0.0
      %941 = vmatprep.subr.mxu0 0.0
      %942 = vmatpush2.msra.mxu0 0.0
      %943 = vmatprep.subr.mxu0 0.0
      %944 = vmatpush2.msra.mxu0 0.0
      %945 = vmatprep.subr.mxu0 0.0
      %946 = vmatpush2.msra.mxu0 0.0
      %947 = vmatprep.subr.mxu0 0.0
      %948 = vmatpush2.msra.mxu0 0.0
      %949 = vmatprep.subr.mxu0 0.0
      %950 = vmatpush2.msra.mxu0 0.0
      %951 = vmatprep.subr.mxu0 0.0
      %952 = vmatpush2.msra.mxu0 0.0
      %953 = vmatprep.subr.mxu0 0.0
      %954 = vmatpush2.msra.mxu0 0.0
      %955 = vmatprep.subr.mxu0 0.0
      %956 = vmatpush2.msra.mxu0 0.0
      %957 = vmatprep.subr.mxu0 0.0
      %958 = vmatpush2.msra.mxu0 0.0
      %959 = vmatprep.mubr.f32.mxu0 0.0
      %960 = vmatmul.mubr.f32.gmra.mxu0 %v893
      %v961 = vpop.f32.mrf.mxu0
      %v962 = vadd.f32 0.0, %v961
      %v963 = vpop.f32.mrf.mxu0
      %964 = vdwg.mxu0
      %v965 = vadd.f32 %v870, %v962
      %v966 = vld [vmem:[#allocation5] sm:$0x1]
      %v968 = vlaneseq
      %v969 = vshrl.u32 %v968, 7
      %v970 = vsub.s32 0, %v969
      %v971 = vrot.slane %v966, %v970
      %972 = vset.pattern.permute.xlu0 0
      %973 = vperm.xlu0 %972, %v971
      %v974 = vpop.permute.xlu0 %973
      %v976 = vmul.f32 %v965, %v974
      %v977 = vld [vmem:[%s6] sm:$0x1]
      %v979 = vlaneseq
      %v980 = vshrl.u32 %v979, 7
      %v981 = vsub.s32 0, %v980
      %v982 = vrot.slane %v977, %v981
      %v984 = vadd.f32 %v976, %v982
      %v985 = vmax.f32 %v984, 0.0
      %v986 = vadd.f32 %v689, %v985
      %987 = vst [vmem:[%s374] sm:$0xff] %v986
      // Predicated region
      $region57: #{a_call__.3} parent=51 // pred_check
        %p988 = pneg %p379
      $region58: #{a_call__.3} parent=51 // pred_check_branch
        %990 = sbr.rel (%p988) target = $region60
      $region59: #{a_call__.3} parent=51 // pred_region
        %991 = vst [vmem:[%s377] sm:$0x1] 0.0
      $region60: #{a_call__.3} parent=51 // pred_fallthru
        _
      %v992 = vld [vmem:[%s377] sm:$0x1]
      %v993 = vmul.f32 %v986, %v986
      %v994 = vrot.slane %v993, 4
      %v995 = vadd.f32 %v993, %v994
      %v996 = vrot.slane %v995, 2
      %v997 = vadd.f32 %v995, %v996
      %v998 = vrot.slane %v997, 1
      %v999 = vadd.f32 %v997, %v998
      %v1000 = vadd.f32 %v992, %v999
      %1001 = vst [vmem:[%s377] sm:$0x1] %v1000
      %p1002 = scmp.lt.s32.totalorder %s29, 1
      %s1003 = scalar_select %p1002, %s29, 1
      %p1004 = scmp.lt.s32.totalorder %s30, 0
      %s1005 = scalar_select %p1004, %s30, 0
      %s1006 = sadd.s32 %s1005, %s1003
      %s1007 = smul.addr %s1006, 8
      %s1008 = scalar_lea.vmem %s8, %s1007
      %p1009 = scmp.lt.s32.totalorder %s29, 1
      %s1010 = scalar_select %p1009, %s29, 1
      %s1011 = scalar_lea.vmem %s9, %s1010
      // Predicated region
      $region61: #{a_call__.3} parent=51 // pred_check
        %p1012 = pneg %p235
      $region62: #{a_call__.3} parent=51 // pred_check_branch
        %1014 = sbr.rel (%p1012) target = $region64
      $region63: #{a_call__.3} parent=51 // pred_region
        _
      $region64: #{a_call__.3} parent=51 // pred_fallthru
        _
      // Predicated region
      $region65: #{a_call__.3} parent=51 // pred_check
        %p1015 = pneg %p261
      $region66: #{a_call__.3} parent=51 // pred_check_branch
        %1017 = sbr.rel (%p1015) target = $region68
      $region67: #{a_call__.3} parent=51 // pred_region
        _
      $region68: #{a_call__.3} parent=51 // pred_fallthru
        _
    $region52: #{a_call__.3} parent=5 // pred_fallthru
      _
    %p1018 = scmp.le.s32.totalorder 2, %s20
    // Predicated region
    $region69: #{a_call__.3} parent=5 // pred_check
      %p1019 = pneg %p1018
    $region70: #{a_call__.3} parent=5 // pred_check_branch
      %1021 = sbr.rel (%p1019) target = $region72
    $region71: #{a_call__.3} parent=5 // pred_region
      %s1022 = ssub.s32 %s20, 2
      // Predicated region
      $region73: #{a_call__.3} parent=71 // pred_check
        %p1023 = pneg %p241
      $region74: #{a_call__.3} parent=71 // pred_check_branch
        %1025 = sbr.rel (%p1023) target = $region76
      $region75: #{a_call__.3} parent=71 // pred_region
        %p1026 = scmp.lt.s32.totalorder %s31, 1
        %s1027 = scalar_select %p1026, %s31, 1
        %p1028 = scmp.lt.s32.totalorder %s32, 0
        %s1029 = scalar_select %p1028, %s32, 0
        %s1030 = sadd.s32 %s1029, %s1027
        %s1031 = smul.addr %s1030, 8
        %s1032 = scalar_lea.vmem %s8, %s1031
      $region76: #{a_call__.3} parent=71 // pred_fallthru
        _
      // Predicated region
      $region77: #{a_call__.3} parent=71 // pred_check
        %p1033 = pneg %p267
      $region78: #{a_call__.3} parent=71 // pred_check_branch
        %1035 = sbr.rel (%p1033) target = $region80
      $region79: #{a_call__.3} parent=71 // pred_region
        %p1036 = scmp.lt.s32.totalorder %s31, 1
        %s1037 = scalar_select %p1036, %s31, 1
        %s1038 = scalar_lea.vmem %s9, %s1037
      $region80: #{a_call__.3} parent=71 // pred_fallthru
        _
    $region72: #{a_call__.3} parent=5 // pred_fallthru
      _
  $region6: #{a_call__.3} parent=0 // loop_footer
    %s24 = sadd.s32 1, %s20
  $region7: #{a_call__.3} parent=0 // loop_footer_branch
    %19 = sbr.rel target = $region3
  $region8: #{a_call__.3} parent=0 // loop_exit
    _

</llo_original>
